<compile_context>
chip_gen: v7x
topology: tpu7x:2x2x1
jax: 0.10.0
libtpu: 0.0.40
codegen_flags: <defaults>
</compile_context>

<pallas_src>
import jax
import jax.numpy as jnp
from jax import lax
from jax.experimental import pallas as pl
from jax.experimental.pallas import tpu as pltpu

EPS = 1e-5
LANE = 128


def _round_up(x, m):
    return (x + m - 1) // m * m


def bottleneck_kernel(x_ref, w1_ref, w2_ref, w3_ref,
                      g1_ref, b1_ref, g2_ref, b2_ref, g3_ref, b3_ref,
                      out_ref, pad_ref):
    N, H, W, Cp = x_ref.shape
    Mp = w1_ref.shape[1]                      # padded mid channels (=128)
    Wp2 = pad_ref.shape[2]                    # padded (W+2) rounded to sublanes
    NHW = N * H * W
    inv_n = 1.0 / NHW

    def bn(y, g, b, relu):
        # Training-mode BatchNorm folded to per-channel scale/shift.
        # Single-pass stats: sum and sum-of-squares (biased variance).
        s = jnp.sum(y, axis=0, keepdims=True)
        ss = jnp.sum(y * y, axis=0, keepdims=True)
        mean = s * inv_n
        var = ss * inv_n - mean * mean
        scale = g * lax.rsqrt(var + EPS)      # zero-padded channels: g=0 -> scale=0
        shift = b - mean * scale
        y = y * scale + shift
        return jnp.maximum(y, 0.0) if relu else y

    # --- 1x1 conv (Cp -> Mp) + BN + ReLU  (bf16 MXU inputs, f32 accumulate) ---
    y1 = jnp.dot(x_ref[...].reshape(NHW, Cp).astype(jnp.bfloat16), w1_ref[...],
                 preferred_element_type=jnp.float32)
    y1 = bn(y1, g1_ref[...], b1_ref[...], relu=True)

    # --- 3x3 conv (Mp -> Mp), stride 1, padding 1, via im2col ---------------
    # Zero only the border cells that the 3x3 windows actually read.
    zrow = jnp.zeros((N, 1, Wp2, Mp), jnp.float32)
    pad_ref[:, 0:1, :, :] = zrow
    pad_ref[:, H + 1:H + 2, :, :] = zrow
    zcol = jnp.zeros((N, H, 1, Mp), jnp.float32)
    pad_ref[:, 1:H + 1, 0:1, :] = zcol
    pad_ref[:, 1:H + 1, W + 1:W + 2, :] = zcol
    pad_ref[:, 1:H + 1, 1:W + 1, :] = y1.reshape(N, H, W, Mp)
    padded = pad_ref[...]

    cols = [padded[:, kh:kh + H, kw:kw + W, :]
            .reshape(NHW, Mp).astype(jnp.bfloat16)
            for kh in range(3) for kw in range(3)]
    im2col = jnp.concatenate(cols, axis=-1)               # (NHW, 9*Mp), lane-dense
    y2 = jnp.dot(im2col, w2_ref[...], preferred_element_type=jnp.float32)
    y2 = bn(y2, g2_ref[...], b2_ref[...], relu=True)

    # --- 1x1 conv (Mp -> Cp) + BN --------------------------------------------
    y3 = jnp.dot(y2.astype(jnp.bfloat16), w3_ref[...],
                 preferred_element_type=jnp.float32)
    y3 = bn(y3, g3_ref[...], b3_ref[...], relu=False)

    # --- residual add (re-read x_ref; it is already VMEM-resident) + ReLU ----
    out = jnp.maximum(y3 + x_ref[...].reshape(NHW, Cp), 0.0)
    out_ref[...] = out.reshape(N, H, W, Cp).astype(out_ref.dtype)


def bottleneck_forward(x_nchw, params):
    """x_nchw: (N, C, H, W) float32, like the PyTorch module input."""
    N, C, H, W = x_nchw.shape
    M = params["w1"].shape[1]                 # mid = C // 4
    Cp = _round_up(C, LANE)                   # lane-dense channel widths
    Mp = _round_up(M, LANE)
    Wp2 = _round_up(W + 2, 8)                 # sublane-aligned padded width

    # NHWC, channels zero-padded to 128 lanes.
    x = jnp.transpose(x_nchw, (0, 2, 3, 1))
    x = jnp.pad(x, ((0, 0), (0, 0), (0, 0), (0, Cp - C)))

    # Lane-dense, bf16 weights (zero padding keeps padded channels exactly 0).
    w1 = jnp.zeros((Cp, Mp), jnp.bfloat16).at[:C, :M].set(
        params["w1"].astype(jnp.bfloat16))
    w2 = jnp.zeros((9, Mp, Mp), jnp.bfloat16).at[:, :M, :M].set(
        params["w2"].astype(jnp.bfloat16)).reshape(9 * Mp, Mp)
    w3 = jnp.zeros((Mp, Cp), jnp.bfloat16).at[:M, :C].set(
        params["w3"].astype(jnp.bfloat16))

    def padc(v, n):                           # pad (1, c) gamma/beta to lane width
        return jnp.pad(v, ((0, 0), (0, n - v.shape[1])))
    g1, b1 = padc(params["g1"], Mp), padc(params["b1"], Mp)
    g2, b2 = padc(params["g2"], Mp), padc(params["b2"], Mp)
    g3, b3 = padc(params["g3"], Cp), padc(params["b3"], Cp)

    NHW = N * H * W
    flops = 2 * NHW * (Cp * Mp + 9 * Mp * Mp + Mp * Cp) + 30 * NHW * max(Mp, Cp)
    bytes_accessed = (2 * NHW * Cp * 4                       # x in + out
                      + (w1.size + w2.size + w3.size) * 2    # bf16 weights
                      + 6 * max(Mp, Cp) * 4)                 # gammas/betas

    vmem = pl.BlockSpec(memory_space=pltpu.MemorySpace.VMEM)
    out = pl.pallas_call(
        bottleneck_kernel,
        out_shape=jax.ShapeDtypeStruct((N, H, W, Cp), jnp.float32),
        in_specs=[vmem] * 10,
        out_specs=vmem,
        scratch_shapes=[pltpu.VMEM((N, H + 2, Wp2, Mp), jnp.float32)],
        compiler_params=pltpu.CompilerParams(
            vmem_limit_bytes=48 * 1024 * 1024),   # stays within v7x's 64 MiB VMEM
        cost_estimate=pl.CostEstimate(flops=int(flops),
                                      transcendentals=int(2 * Mp + Cp),
                                      bytes_accessed=int(bytes_accessed)),
    )(x, w1, w2, w3, g1, b1, g2, b2, g3, b3)

    out = out[..., :C]                        # strip channel padding
    return jnp.transpose(out, (0, 3, 1, 2))   # -> NCHW


def init_params(key, in_channels, out_channels):
    mid = in_channels // 4
    ks = jax.random.split(key, 9)
    w1 = 0.1 * jax.random.normal(ks[0], (in_channels, mid), jnp.float32)
    w2_hwio = 0.1 * jax.random.normal(ks[1], (3, 3, mid, mid), jnp.float32)
    w3 = 0.1 * jax.random.normal(ks[2], (mid, out_channels), jnp.float32)
    g1 = 1.0 + 0.1 * jax.random.normal(ks[3], (1, mid), jnp.float32)
    b1 = 0.1 * jax.random.normal(ks[4], (1, mid), jnp.float32)
    g2 = 1.0 + 0.1 * jax.random.normal(ks[5], (1, mid), jnp.float32)
    b2 = 0.1 * jax.random.normal(ks[6], (1, mid), jnp.float32)
    g3 = 1.0 + 0.1 * jax.random.normal(ks[7], (1, out_channels), jnp.float32)
    b3 = 0.1 * jax.random.normal(ks[8], (1, out_channels), jnp.float32)
    return dict(w1=w1, w2=w2_hwio.reshape(9, mid, mid), w2_hwio=w2_hwio, w3=w3,
                g1=g1, b1=b1, g2=g2, b2=b2, g3=g3, b3=b3)


def ref_forward(x_nchw, params):
    """Pure-JAX f32 reference (same math as the PyTorch module in train mode)."""
    x = jnp.transpose(x_nchw, (0, 2, 3, 1))
    dn = ("NHWC", "HWIO", "NHWC")

    def bn(y, g, b):
        mean = jnp.mean(y, axis=(0, 1, 2), keepdims=True)
        var = jnp.mean((y - mean) ** 2, axis=(0, 1, 2), keepdims=True)
        return (g.reshape(1, 1, 1, -1) * (y - mean) / jnp.sqrt(var + EPS)
                + b.reshape(1, 1, 1, -1))

    w1 = params["w1"].reshape(1, 1, *params["w1"].shape)
    w3 = params["w3"].reshape(1, 1, *params["w3"].shape)
    y = lax.conv_general_dilated(x, w1, (1, 1), "VALID", dimension_numbers=dn)
    y = jax.nn.relu(bn(y, params["g1"], params["b1"]))
    y = lax.conv_general_dilated(y, params["w2_hwio"], (1, 1), "SAME",
                                 dimension_numbers=dn)
    y = jax.nn.relu(bn(y, params["g2"], params["b2"]))
    y = lax.conv_general_dilated(y, w3, (1, 1), "VALID", dimension_numbers=dn)
    y = bn(y, params["g3"], params["b3"])
    y = jax.nn.relu(y + x)
    return jnp.transpose(y, (0, 3, 1, 2))


if __name__ == "__main__":
    N, C, H, W = 2, 16, 8, 8            # in_channels = out_channels = 16, mid = 4
    key = jax.random.PRNGKey(0)
    kx, kp = jax.random.split(key)
    x = jax.random.normal(kx, (N, C, H, W), jnp.float32)
    params = init_params(kp, C, C)

    y = jax.block_until_ready(bottleneck_forward(x, params))
    y_ref = ref_forward(x, params)
    assert y.shape == (N, C, H, W)

    # bf16 MXU inputs (per perf guidance) => looser tolerance vs the f32 reference.
    if not jnp.allclose(y, y_ref, atol=5e-2, rtol=5e-2):
        err = float(jnp.max(jnp.abs(y - y_ref)))
        raise AssertionError(
            f"Pallas kernel mismatch vs JAX reference (max abs err {err:.3e})")
    print("KERNEL_OK")
</pallas_src>

<mosaic_0001>
module attributes {stable_mosaic.version = 11 : i64} {
  func.func @bottleneck_kernel(%arg0: memref<2x8x8x128xf32, #tpu.memory_space<vmem>>, %arg1: memref<128x128xbf16, #tpu.memory_space<vmem>>, %arg2: memref<1152x128xbf16, #tpu.memory_space<vmem>>, %arg3: memref<128x128xbf16, #tpu.memory_space<vmem>>, %arg4: memref<1x128xf32, #tpu.memory_space<vmem>>, %arg5: memref<1x128xf32, #tpu.memory_space<vmem>>, %arg6: memref<1x128xf32, #tpu.memory_space<vmem>>, %arg7: memref<1x128xf32, #tpu.memory_space<vmem>>, %arg8: memref<1x128xf32, #tpu.memory_space<vmem>>, %arg9: memref<1x128xf32, #tpu.memory_space<vmem>>, %arg10: memref<2x8x8x128xf32, #tpu.memory_space<vmem>>, %arg11: memref<2x10x16x128xf32, #tpu.memory_space<vmem>>) attributes {dimension_semantics = [], scalar_prefetch = 0 : i64, scratch_operands = 1 : i64, tpu.core_type = #tpu.core_type<tc>} {
    %c0 = arith.constant 0 : index
    %c0_0 = arith.constant 0 : index
    %c0_1 = arith.constant 0 : index
    %c0_2 = arith.constant 0 : index
    %0 = vector.load %arg0[%c0, %c0_0, %c0_1, %c0_2] : memref<2x8x8x128xf32, #tpu.memory_space<vmem>>, vector<2x8x8x128xf32>
    %1 = vector.shape_cast %0 : vector<2x8x8x128xf32> to vector<128x128xf32>
    %2 = arith.truncf %1 : vector<128x128xf32> to vector<128x128xbf16>
    %c0_3 = arith.constant 0 : index
    %c0_4 = arith.constant 0 : index
    %3 = vector.load %arg1[%c0_3, %c0_4] : memref<128x128xbf16, #tpu.memory_space<vmem>>, vector<128x128xbf16>
    %cst = arith.constant dense<0.000000e+00> : vector<128x128xf32>
    %4 = tpu.matmul %2, %3, %cst {dimension_numbers = #tpu.dot_dimension_numbers<[1], [0], [0], [1], [0, 0, 1, 1], [], []>} : vector<128x128xbf16>, vector<128x128xbf16>, vector<128x128xf32> -> vector<128x128xf32>
    %c0_5 = arith.constant 0 : index
    %c0_6 = arith.constant 0 : index
    %5 = vector.load %arg4[%c0_5, %c0_6] : memref<1x128xf32, #tpu.memory_space<vmem>>, vector<1x128xf32>
    %c0_7 = arith.constant 0 : index
    %c0_8 = arith.constant 0 : index
    %6 = vector.load %arg5[%c0_7, %c0_8] : memref<1x128xf32, #tpu.memory_space<vmem>>, vector<1x128xf32>
    %cst_9 = arith.constant dense<0.000000e+00> : vector<128xf32>
    %7 = vector.multi_reduction <add>, %4, %cst_9 [0] : vector<128x128xf32> to vector<128xf32>
    %8 = vector.shape_cast %7 : vector<128xf32> to vector<1x128xf32>
    %9 = arith.mulf %4, %4 : vector<128x128xf32>
    %cst_10 = arith.constant dense<0.000000e+00> : vector<128xf32>
    %10 = vector.multi_reduction <add>, %9, %cst_10 [0] : vector<128x128xf32> to vector<128xf32>
    %11 = vector.shape_cast %10 : vector<128xf32> to vector<1x128xf32>
    %cst_11 = arith.constant 7.812500e-03 : f32
    %12 = vector.broadcast %cst_11 : f32 to vector<1x128xf32>
    %13 = arith.mulf %8, %12 : vector<1x128xf32>
    %cst_12 = arith.constant 7.812500e-03 : f32
    %14 = vector.broadcast %cst_12 : f32 to vector<1x128xf32>
    %15 = arith.mulf %11, %14 : vector<1x128xf32>
    %16 = arith.mulf %13, %13 : vector<1x128xf32>
    %17 = arith.subf %15, %16 : vector<1x128xf32>
    %cst_13 = arith.constant 9.99999974E-6 : f32
    %18 = vector.broadcast %cst_13 : f32 to vector<1x128xf32>
    %19 = arith.addf %17, %18 : vector<1x128xf32>
    %20 = math.rsqrt %19 : vector<1x128xf32>
    %21 = arith.mulf %5, %20 : vector<1x128xf32>
    %22 = arith.mulf %13, %21 : vector<1x128xf32>
    %23 = arith.subf %6, %22 : vector<1x128xf32>
    %24 = vector.broadcast %21 : vector<1x128xf32> to vector<128x128xf32>
    %25 = arith.mulf %4, %24 : vector<128x128xf32>
    %26 = vector.broadcast %23 : vector<1x128xf32> to vector<128x128xf32>
    %27 = arith.addf %25, %26 : vector<128x128xf32>
    %cst_14 = arith.constant 0.000000e+00 : f32
    %28 = vector.broadcast %cst_14 : f32 to vector<128x128xf32>
    %29 = arith.maximumf %27, %28 : vector<128x128xf32>
    %cst_15 = arith.constant 0.000000e+00 : f32
    %30 = vector.broadcast %cst_15 : f32 to vector<2x1x16x128xf32>
    %c0_16 = arith.constant 0 : index
    %c0_17 = arith.constant 0 : index
    %c0_18 = arith.constant 0 : index
    %c0_19 = arith.constant 0 : index
    %31 = vector.load %arg11[%c0_16, %c0_17, %c0_18, %c0_19] : memref<2x10x16x128xf32, #tpu.memory_space<vmem>>, vector<2x1x16x128xf32>
    tpu.vector_store %arg11[%c0_16, %c0_17, %c0_18, %c0_19], %30 {strides = array<i32>} : memref<2x10x16x128xf32, #tpu.memory_space<vmem>>, vector<2x1x16x128xf32>,
    %c0_20 = arith.constant 0 : index
    %c9 = arith.constant 9 : index
    %c0_21 = arith.constant 0 : index
    %c0_22 = arith.constant 0 : index
    %32 = vector.load %arg11[%c0_20, %c9, %c0_21, %c0_22] : memref<2x10x16x128xf32, #tpu.memory_space<vmem>>, vector<2x1x16x128xf32>
    tpu.vector_store %arg11[%c0_20, %c9, %c0_21, %c0_22], %30 {strides = array<i32>} : memref<2x10x16x128xf32, #tpu.memory_space<vmem>>, vector<2x1x16x128xf32>,
    %cst_23 = arith.constant 0.000000e+00 : f32
    %33 = vector.broadcast %cst_23 : f32 to vector<2x8x1x128xf32>
    %c0_24 = arith.constant 0 : index
    %c1 = arith.constant 1 : index
    %c0_25 = arith.constant 0 : index
    %c0_26 = arith.constant 0 : index
    %34 = vector.load %arg11[%c0_24, %c1, %c0_25, %c0_26] : memref<2x10x16x128xf32, #tpu.memory_space<vmem>>, vector<2x8x1x128xf32>
    tpu.vector_store %arg11[%c0_24, %c1, %c0_25, %c0_26], %33 {strides = array<i32>} : memref<2x10x16x128xf32, #tpu.memory_space<vmem>>, vector<2x8x1x128xf32>,
    %c0_27 = arith.constant 0 : index
    %c1_28 = arith.constant 1 : index
    %c9_29 = arith.constant 9 : index
    %c0_30 = arith.constant 0 : index
    %35 = vector.load %arg11[%c0_27, %c1_28, %c9_29, %c0_30] : memref<2x10x16x128xf32, #tpu.memory_space<vmem>>, vector<2x8x1x128xf32>
    tpu.vector_store %arg11[%c0_27, %c1_28, %c9_29, %c0_30], %33 {strides = array<i32>} : memref<2x10x16x128xf32, #tpu.memory_space<vmem>>, vector<2x8x1x128xf32>,
    %36 = vector.shape_cast %29 : vector<128x128xf32> to vector<2x8x8x128xf32>
    %c0_31 = arith.constant 0 : index
    %c1_32 = arith.constant 1 : index
    %c1_33 = arith.constant 1 : index
    %c0_34 = arith.constant 0 : index
    %37 = vector.load %arg11[%c0_31, %c1_32, %c1_33, %c0_34] : memref<2x10x16x128xf32, #tpu.memory_space<vmem>>, vector<2x8x8x128xf32>
    tpu.vector_store %arg11[%c0_31, %c1_32, %c1_33, %c0_34], %36 {strides = array<i32>} : memref<2x10x16x128xf32, #tpu.memory_space<vmem>>, vector<2x8x8x128xf32>,
    %c0_35 = arith.constant 0 : index
    %c0_36 = arith.constant 0 : index
    %c0_37 = arith.constant 0 : index
    %c0_38 = arith.constant 0 : index
    %38 = vector.load %arg11[%c0_35, %c0_36, %c0_37, %c0_38] : memref<2x10x16x128xf32, #tpu.memory_space<vmem>>, vector<2x10x16x128xf32>
    %39 = vector.extract_strided_slice %38 {offsets = [0, 0, 0, 0], sizes = [2, 8, 8, 128], strides = [1, 1, 1, 1]} : vector<2x10x16x128xf32> to vector<2x8x8x128xf32>
    %40 = vector.shape_cast %39 : vector<2x8x8x128xf32> to vector<128x128xf32>
    %41 = arith.truncf %40 : vector<128x128xf32> to vector<128x128xbf16>
    %42 = vector.extract_strided_slice %38 {offsets = [0, 0, 1, 0], sizes = [2, 8, 8, 128], strides = [1, 1, 1, 1]} : vector<2x10x16x128xf32> to vector<2x8x8x128xf32>
    %43 = vector.shape_cast %42 : vector<2x8x8x128xf32> to vector<128x128xf32>
    %44 = arith.truncf %43 : vector<128x128xf32> to vector<128x128xbf16>
    %45 = vector.extract_strided_slice %38 {offsets = [0, 0, 2, 0], sizes = [2, 8, 8, 128], strides = [1, 1, 1, 1]} : vector<2x10x16x128xf32> to vector<2x8x8x128xf32>
    %46 = vector.shape_cast %45 : vector<2x8x8x128xf32> to vector<128x128xf32>
    %47 = arith.truncf %46 : vector<128x128xf32> to vector<128x128xbf16>
    %48 = vector.extract_strided_slice %38 {offsets = [0, 1, 0, 0], sizes = [2, 8, 8, 128], strides = [1, 1, 1, 1]} : vector<2x10x16x128xf32> to vector<2x8x8x128xf32>
    %49 = vector.shape_cast %48 : vector<2x8x8x128xf32> to vector<128x128xf32>
    %50 = arith.truncf %49 : vector<128x128xf32> to vector<128x128xbf16>
    %51 = vector.extract_strided_slice %38 {offsets = [0, 1, 1, 0], sizes = [2, 8, 8, 128], strides = [1, 1, 1, 1]} : vector<2x10x16x128xf32> to vector<2x8x8x128xf32>
    %52 = vector.shape_cast %51 : vector<2x8x8x128xf32> to vector<128x128xf32>
    %53 = arith.truncf %52 : vector<128x128xf32> to vector<128x128xbf16>
    %54 = vector.extract_strided_slice %38 {offsets = [0, 1, 2, 0], sizes = [2, 8, 8, 128], strides = [1, 1, 1, 1]} : vector<2x10x16x128xf32> to vector<2x8x8x128xf32>
    %55 = vector.shape_cast %54 : vector<2x8x8x128xf32> to vector<128x128xf32>
    %56 = arith.truncf %55 : vector<128x128xf32> to vector<128x128xbf16>
    %57 = vector.extract_strided_slice %38 {offsets = [0, 2, 0, 0], sizes = [2, 8, 8, 128], strides = [1, 1, 1, 1]} : vector<2x10x16x128xf32> to vector<2x8x8x128xf32>
    %58 = vector.shape_cast %57 : vector<2x8x8x128xf32> to vector<128x128xf32>
    %59 = arith.truncf %58 : vector<128x128xf32> to vector<128x128xbf16>
    %60 = vector.extract_strided_slice %38 {offsets = [0, 2, 1, 0], sizes = [2, 8, 8, 128], strides = [1, 1, 1, 1]} : vector<2x10x16x128xf32> to vector<2x8x8x128xf32>
    %61 = vector.shape_cast %60 : vector<2x8x8x128xf32> to vector<128x128xf32>
    %62 = arith.truncf %61 : vector<128x128xf32> to vector<128x128xbf16>
    %63 = vector.extract_strided_slice %38 {offsets = [0, 2, 2, 0], sizes = [2, 8, 8, 128], strides = [1, 1, 1, 1]} : vector<2x10x16x128xf32> to vector<2x8x8x128xf32>
    %64 = vector.shape_cast %63 : vector<2x8x8x128xf32> to vector<128x128xf32>
    %65 = arith.truncf %64 : vector<128x128xf32> to vector<128x128xbf16>
    %66 = tpu.concatenate %41, %44, %47, %50, %53, %56, %59, %62, %65 in 1 : vector<128x128xbf16>, vector<128x128xbf16>, vector<128x128xbf16>, vector<128x128xbf16>, vector<128x128xbf16>, vector<128x128xbf16>, vector<128x128xbf16>, vector<128x128xbf16>, vector<128x128xbf16> -> vector<128x1152xbf16>
    %c0_39 = arith.constant 0 : index
    %c0_40 = arith.constant 0 : index
    %67 = vector.load %arg2[%c0_39, %c0_40] : memref<1152x128xbf16, #tpu.memory_space<vmem>>, vector<1152x128xbf16>
    %cst_41 = arith.constant dense<0.000000e+00> : vector<128x128xf32>
    %68 = tpu.matmul %66, %67, %cst_41 {dimension_numbers = #tpu.dot_dimension_numbers<[1], [0], [0], [1], [0, 0, 1, 1], [], []>} : vector<128x1152xbf16>, vector<1152x128xbf16>, vector<128x128xf32> -> vector<128x128xf32>
    %c0_42 = arith.constant 0 : index
    %c0_43 = arith.constant 0 : index
    %69 = vector.load %arg6[%c0_42, %c0_43] : memref<1x128xf32, #tpu.memory_space<vmem>>, vector<1x128xf32>
    %c0_44 = arith.constant 0 : index
    %c0_45 = arith.constant 0 : index
    %70 = vector.load %arg7[%c0_44, %c0_45] : memref<1x128xf32, #tpu.memory_space<vmem>>, vector<1x128xf32>
    %cst_46 = arith.constant dense<0.000000e+00> : vector<128xf32>
    %71 = vector.multi_reduction <add>, %68, %cst_46 [0] : vector<128x128xf32> to vector<128xf32>
    %72 = vector.shape_cast %71 : vector<128xf32> to vector<1x128xf32>
    %73 = arith.mulf %68, %68 : vector<128x128xf32>
    %cst_47 = arith.constant dense<0.000000e+00> : vector<128xf32>
    %74 = vector.multi_reduction <add>, %73, %cst_47 [0] : vector<128x128xf32> to vector<128xf32>
    %75 = vector.shape_cast %74 : vector<128xf32> to vector<1x128xf32>
    %cst_48 = arith.constant 7.812500e-03 : f32
    %76 = vector.broadcast %cst_48 : f32 to vector<1x128xf32>
    %77 = arith.mulf %72, %76 : vector<1x128xf32>
    %cst_49 = arith.constant 7.812500e-03 : f32
    %78 = vector.broadcast %cst_49 : f32 to vector<1x128xf32>
    %79 = arith.mulf %75, %78 : vector<1x128xf32>
    %80 = arith.mulf %77, %77 : vector<1x128xf32>
    %81 = arith.subf %79, %80 : vector<1x128xf32>
    %cst_50 = arith.constant 9.99999974E-6 : f32
    %82 = vector.broadcast %cst_50 : f32 to vector<1x128xf32>
    %83 = arith.addf %81, %82 : vector<1x128xf32>
    %84 = math.rsqrt %83 : vector<1x128xf32>
    %85 = arith.mulf %69, %84 : vector<1x128xf32>
    %86 = arith.mulf %77, %85 : vector<1x128xf32>
    %87 = arith.subf %70, %86 : vector<1x128xf32>
    %88 = vector.broadcast %85 : vector<1x128xf32> to vector<128x128xf32>
    %89 = arith.mulf %68, %88 : vector<128x128xf32>
    %90 = vector.broadcast %87 : vector<1x128xf32> to vector<128x128xf32>
    %91 = arith.addf %89, %90 : vector<128x128xf32>
    %cst_51 = arith.constant 0.000000e+00 : f32
    %92 = vector.broadcast %cst_51 : f32 to vector<128x128xf32>
    %93 = arith.maximumf %91, %92 : vector<128x128xf32>
    %94 = arith.truncf %93 : vector<128x128xf32> to vector<128x128xbf16>
    %c0_52 = arith.constant 0 : index
    %c0_53 = arith.constant 0 : index
    %95 = vector.load %arg3[%c0_52, %c0_53] : memref<128x128xbf16, #tpu.memory_space<vmem>>, vector<128x128xbf16>
    %cst_54 = arith.constant dense<0.000000e+00> : vector<128x128xf32>
    %96 = tpu.matmul %94, %95, %cst_54 {dimension_numbers = #tpu.dot_dimension_numbers<[1], [0], [0], [1], [0, 0, 1, 1], [], []>} : vector<128x128xbf16>, vector<128x128xbf16>, vector<128x128xf32> -> vector<128x128xf32>
    %c0_55 = arith.constant 0 : index
    %c0_56 = arith.constant 0 : index
    %97 = vector.load %arg8[%c0_55, %c0_56] : memref<1x128xf32, #tpu.memory_space<vmem>>, vector<1x128xf32>
    %c0_57 = arith.constant 0 : index
    %c0_58 = arith.constant 0 : index
    %98 = vector.load %arg9[%c0_57, %c0_58] : memref<1x128xf32, #tpu.memory_space<vmem>>, vector<1x128xf32>
    %cst_59 = arith.constant dense<0.000000e+00> : vector<128xf32>
    %99 = vector.multi_reduction <add>, %96, %cst_59 [0] : vector<128x128xf32> to vector<128xf32>
    %100 = vector.shape_cast %99 : vector<128xf32> to vector<1x128xf32>
    %101 = arith.mulf %96, %96 : vector<128x128xf32>
    %cst_60 = arith.constant dense<0.000000e+00> : vector<128xf32>
    %102 = vector.multi_reduction <add>, %101, %cst_60 [0] : vector<128x128xf32> to vector<128xf32>
    %103 = vector.shape_cast %102 : vector<128xf32> to vector<1x128xf32>
    %cst_61 = arith.constant 7.812500e-03 : f32
    %104 = vector.broadcast %cst_61 : f32 to vector<1x128xf32>
    %105 = arith.mulf %100, %104 : vector<1x128xf32>
    %cst_62 = arith.constant 7.812500e-03 : f32
    %106 = vector.broadcast %cst_62 : f32 to vector<1x128xf32>
    %107 = arith.mulf %103, %106 : vector<1x128xf32>
    %108 = arith.mulf %105, %105 : vector<1x128xf32>
    %109 = arith.subf %107, %108 : vector<1x128xf32>
    %cst_63 = arith.constant 9.99999974E-6 : f32
    %110 = vector.broadcast %cst_63 : f32 to vector<1x128xf32>
    %111 = arith.addf %109, %110 : vector<1x128xf32>
    %112 = math.rsqrt %111 : vector<1x128xf32>
    %113 = arith.mulf %97, %112 : vector<1x128xf32>
    %114 = arith.mulf %105, %113 : vector<1x128xf32>
    %115 = arith.subf %98, %114 : vector<1x128xf32>
    %116 = vector.broadcast %113 : vector<1x128xf32> to vector<128x128xf32>
    %117 = arith.mulf %96, %116 : vector<128x128xf32>
    %118 = vector.broadcast %115 : vector<1x128xf32> to vector<128x128xf32>
    %119 = arith.addf %117, %118 : vector<128x128xf32>
    %c0_64 = arith.constant 0 : index
    %c0_65 = arith.constant 0 : index
    %c0_66 = arith.constant 0 : index
    %c0_67 = arith.constant 0 : index
    %120 = vector.load %arg0[%c0_64, %c0_65, %c0_66, %c0_67] : memref<2x8x8x128xf32, #tpu.memory_space<vmem>>, vector<2x8x8x128xf32>
    %121 = vector.shape_cast %120 : vector<2x8x8x128xf32> to vector<128x128xf32>
    %122 = arith.addf %119, %121 : vector<128x128xf32>
    %cst_68 = arith.constant 0.000000e+00 : f32
    %123 = vector.broadcast %cst_68 : f32 to vector<128x128xf32>
    %124 = arith.maximumf %122, %123 : vector<128x128xf32>
    %125 = vector.shape_cast %124 : vector<128x128xf32> to vector<2x8x8x128xf32>
    %c0_69 = arith.constant 0 : index
    %c0_70 = arith.constant 0 : index
    %c0_71 = arith.constant 0 : index
    %c0_72 = arith.constant 0 : index
    %126 = vector.load %arg10[%c0_69, %c0_70, %c0_71, %c0_72] : memref<2x8x8x128xf32, #tpu.memory_space<vmem>>, vector<2x8x8x128xf32>
    tpu.vector_store %arg10[%c0_69, %c0_70, %c0_71, %c0_72], %125 {strides = array<i32>} : memref<2x8x8x128xf32, #tpu.memory_space<vmem>>, vector<2x8x8x128xf32>,
    return
  }
}

</mosaic_0001>

<llo_original>
// kernel: tpu_custom_call.1
$region0: #{tpu_custom_call.1}
  #allocation0 [shape = 'u32[]', space=smem, size = 0x4, offset = 0x4, fixed_abs, tag = 'smem constant byte address 0x4 - core index']
  #allocation1 [shape = 'u32[144,128]{1,0:T(1,128)}', space=vmem, size = 0x12000, scoped, tag = 'internal scratch']
  #allocation2 [shape = 'f32[2,10,16,128]{3,2,1,0:T(8,128)}', space=vmem, size = 0x28000, scoped, tag = 'scratch operand']
  %s0 = inlined_call_operand.hbm [shape: f32[2,8,8,128], index: 0, kind: input, shape index: {}]
  %s1 = inlined_call_operand.hbm [shape: bf16[128,128], index: 1, kind: input, shape index: {}]
  %s2 = inlined_call_operand.hbm [shape: bf16[1152,128], index: 2, kind: input, shape index: {}]
  %s3 = inlined_call_operand.hbm [shape: bf16[128,128], index: 3, kind: input, shape index: {}]
  %s4 = inlined_call_operand.vmem [shape: f32[1,128], index: 4, kind: input, shape index: {}]
  %s5 = inlined_call_operand.vmem [shape: f32[1,128], index: 5, kind: input, shape index: {}]
  %s6 = inlined_call_operand.vmem [shape: f32[1,128], index: 6, kind: input, shape index: {}]
  %s7 = inlined_call_operand.vmem [shape: f32[1,128], index: 7, kind: input, shape index: {}]
  %s8 = inlined_call_operand.vmem [shape: f32[1,128], index: 8, kind: input, shape index: {}]
  %s9 = inlined_call_operand.vmem [shape: f32[1,128], index: 9, kind: input, shape index: {}]
  %s10 = inlined_call_operand.hbm [shape: f32[2,8,8,128], index: 10, kind: output, shape index: {}]
  %s11 = sld [smem:[#allocation0]]
  $region66: #{tpu_custom_call.1} parent=0
    _
  %s13 = ssub.s32 1, %s11
  %s14 = scalar_select 0, %s13, %s11
  $region1: #{tpu_custom_call.1} parent=0
    #allocation3 [shape = 'u8[65536]{0}', space=vmem, size = 0x10000, scoped, tag = 'input window, operand 0, single buffered']
    #allocation4 [shape = 's32[1]{0}', space=sflag, size = 0x4, scoped, tag = 'scoped memory for tpu_custom_call.1']
    #allocation5 [shape = 's32[1]{0}', space=sflag, size = 0x4, scoped, tag = 'scoped memory for tpu_custom_call.1']
    #allocation6 [shape = 'u8[32768]{0}', space=vmem, size = 0x8000, scoped, tag = 'input window, operand 1, single buffered']
    #allocation7 [shape = 's32[1]{0}', space=sflag, size = 0x4, scoped, tag = 'scoped memory for tpu_custom_call.1']
    #allocation8 [shape = 'u8[294912]{0}', space=vmem, size = 0x48000, scoped, tag = 'input window, operand 2, single buffered']
    #allocation9 [shape = 'u8[32768]{0}', space=vmem, size = 0x8000, scoped, tag = 'input window, operand 3, single buffered']
    #allocation10 [shape = 's32[1]{0}', space=sflag, size = 0x4, scoped, tag = 'scoped memory for tpu_custom_call.1']
    #allocation11 [shape = 'u8[65536]{0}', space=vmem, size = 0x10000, scoped, tag = 'output window, operand 0, single buffered']
    %15 = vsyncpa [#allocation4], 0
    %16 = vsyncpa [#allocation7], 0
    %17 = vsyncpa [#allocation10], 0
    %18 = vsyncpa [#allocation5], 0
    // Predicated region
    $region2: #{tpu_custom_call.1} parent=1 // pred_check
      _
    $region3: #{tpu_custom_call.1} parent=1 // pred_check_branch
      %20 = sbr.rel (0) target = $region5
    $region4: #{tpu_custom_call.1} parent=1 // pred_region
      %s22 = ssub.s32 2048, 2048
      %23 = vsyncadd [#allocation4], %s22
      %s24 = sshll.u32 [#allocation3], 4
      %s25 = int_to_ptr.vmem [resolvable:$true] %s24
      %30 = dma.hbm_to_vmem [thread:$0]  %s0, 2048, %s25, [#allocation4], 128, 128, 8
    $region5: #{tpu_custom_call.1} parent=1 // pred_fallthru
      _
    // Predicated region
    $region6: #{tpu_custom_call.1} parent=1 // pred_check
      _
    $region7: #{tpu_custom_call.1} parent=1 // pred_check_branch
      %32 = sbr.rel (0) target = $region9
    $region8: #{tpu_custom_call.1} parent=1 // pred_region
      %s34 = ssub.s32 1024, 1024
      %35 = vsyncadd [#allocation7], %s34
      %s36 = sshll.u32 [#allocation6], 4
      %s37 = int_to_ptr.vmem [resolvable:$true] %s36
      %42 = dma.hbm_to_vmem [thread:$0]  %s1, 1024, %s37, [#allocation7], 64, 64, 4
    $region9: #{tpu_custom_call.1} parent=1 // pred_fallthru
      _
    // Predicated region
    $region10: #{tpu_custom_call.1} parent=1 // pred_check
      _
    $region11: #{tpu_custom_call.1} parent=1 // pred_check_branch
      %44 = sbr.rel (0) target = $region13
    $region12: #{tpu_custom_call.1} parent=1 // pred_region
      %s46 = ssub.s32 9216, 9216
      %47 = vsyncadd [#allocation7], %s46
      %s48 = sshll.u32 [#allocation8], 4
      %s49 = int_to_ptr.vmem [resolvable:$true] %s48
      %54 = dma.hbm_to_vmem [thread:$0]  %s2, 9216, %s49, [#allocation7], 64, 64, 4
    $region13: #{tpu_custom_call.1} parent=1 // pred_fallthru
      _
    // Predicated region
    $region14: #{tpu_custom_call.1} parent=1 // pred_check
      _
    $region15: #{tpu_custom_call.1} parent=1 // pred_check_branch
      %56 = sbr.rel (0) target = $region17
    $region16: #{tpu_custom_call.1} parent=1 // pred_region
      %s58 = ssub.s32 1024, 1024
      %59 = vsyncadd [#allocation10], %s58
      %s60 = sshll.u32 [#allocation9], 4
      %s61 = int_to_ptr.vmem [resolvable:$true] %s60
      %66 = dma.hbm_to_vmem [thread:$0]  %s3, 1024, %s61, [#allocation10], 64, 64, 4
    $region17: #{tpu_custom_call.1} parent=1 // pred_fallthru
      _
    // Predicated region
    $region18: #{tpu_custom_call.1} parent=1 // pred_check
      _
    $region19: #{tpu_custom_call.1} parent=1 // pred_check_branch
      %68 = sbr.rel (0) target = $region21
    $region20: #{tpu_custom_call.1} parent=1 // pred_region
      _
    $region21: #{tpu_custom_call.1} parent=1 // pred_fallthru
      _
    // Predicated region
    $region22: #{tpu_custom_call.1} parent=1 // pred_check
      _
    $region23: #{tpu_custom_call.1} parent=1 // pred_check_branch
      %70 = sbr.rel (0) target = $region25
    $region24: #{tpu_custom_call.1} parent=1 // pred_region
      _
    $region25: #{tpu_custom_call.1} parent=1 // pred_fallthru
      _
    // Predicated region
    $region26: #{tpu_custom_call.1} parent=1 // pred_check
      _
    $region27: #{tpu_custom_call.1} parent=1 // pred_check_branch
      %72 = sbr.rel (0) target = $region29
    $region28: #{tpu_custom_call.1} parent=1 // pred_region
      _
    $region29: #{tpu_custom_call.1} parent=1 // pred_fallthru
      _
    // Predicated region
    $region30: #{tpu_custom_call.1} parent=1 // pred_check
      _
    $region31: #{tpu_custom_call.1} parent=1 // pred_check_branch
      %74 = sbr.rel (0) target = $region33
    $region32: #{tpu_custom_call.1} parent=1 // pred_region
      _
    $region33: #{tpu_custom_call.1} parent=1 // pred_fallthru
      _
    // Predicated region
    $region34: #{tpu_custom_call.1} parent=1 // pred_check
      _
    $region35: #{tpu_custom_call.1} parent=1 // pred_check_branch
      %76 = sbr.rel (0) target = $region37
    $region36: #{tpu_custom_call.1} parent=1 // pred_region
      _
    $region37: #{tpu_custom_call.1} parent=1 // pred_fallthru
      _
    // Predicated region
    $region38: #{tpu_custom_call.1} parent=1 // pred_check
      _
    $region39: #{tpu_custom_call.1} parent=1 // pred_check_branch
      %78 = sbr.rel (0) target = $region41
    $region40: #{tpu_custom_call.1} parent=1 // pred_region
      _
    $region41: #{tpu_custom_call.1} parent=1 // pred_fallthru
      _
    // Predicated region
    $region42: #{tpu_custom_call.1} parent=1 // pred_check
      _
    $region43: #{tpu_custom_call.1} parent=1 // pred_check_branch
      %80 = sbr.rel (0) target = $region45
    $region44: #{tpu_custom_call.1} parent=1 // pred_region
      %81 = dma.done [#allocation4], 2048
    $region45: #{tpu_custom_call.1} parent=1 // pred_fallthru
      _
    // Predicated region
    $region46: #{tpu_custom_call.1} parent=1 // pred_check
      _
    $region47: #{tpu_custom_call.1} parent=1 // pred_check_branch
      %83 = sbr.rel (0) target = $region49
    $region48: #{tpu_custom_call.1} parent=1 // pred_region
      %84 = dma.done [#allocation7], 1024
    $region49: #{tpu_custom_call.1} parent=1 // pred_fallthru
      _
    // Predicated region
    $region50: #{tpu_custom_call.1} parent=1 // pred_check
      _
    $region51: #{tpu_custom_call.1} parent=1 // pred_check_branch
      %86 = sbr.rel (0) target = $region53
    $region52: #{tpu_custom_call.1} parent=1 // pred_region
      %87 = dma.done [#allocation7], 9216
    $region53: #{tpu_custom_call.1} parent=1 // pred_fallthru
      _
    // Predicated region
    $region54: #{tpu_custom_call.1} parent=1 // pred_check
      _
    $region55: #{tpu_custom_call.1} parent=1 // pred_check_branch
      %89 = sbr.rel (0) target = $region57
    $region56: #{tpu_custom_call.1} parent=1 // pred_region
      %90 = dma.done [#allocation10], 1024
    $region57: #{tpu_custom_call.1} parent=1 // pred_fallthru
      _
    %v92 = vld [vmem:[#allocation3] sm:$0xff]
    %v93 = vld [vmem:[#allocation3 + $0x8] sm:$0xff]
    %v94 = vld [vmem:[#allocation3 + $0x10] sm:$0xff]
    %v95 = vld [vmem:[#allocation3 + $0x18] sm:$0xff]
    %v96 = vld [vmem:[#allocation3 + $0x20] sm:$0xff]
    %v97 = vld [vmem:[#allocation3 + $0x28] sm:$0xff]
    %v98 = vld [vmem:[#allocation3 + $0x30] sm:$0xff]
    %v99 = vld [vmem:[#allocation3 + $0x38] sm:$0xff]
    %v100 = vld [vmem:[#allocation3 + $0x40] sm:$0xff]
    %v101 = vld [vmem:[#allocation3 + $0x48] sm:$0xff]
    %v102 = vld [vmem:[#allocation3 + $0x50] sm:$0xff]
    %v103 = vld [vmem:[#allocation3 + $0x58] sm:$0xff]
    %v104 = vld [vmem:[#allocation3 + $0x60] sm:$0xff]
    %v105 = vld [vmem:[#allocation3 + $0x68] sm:$0xff]
    %v106 = vld [vmem:[#allocation3 + $0x70] sm:$0xff]
    %v107 = vld [vmem:[#allocation3 + $0x78] sm:$0xff]
    %v108 = vpack.c.bf16 %v93, %v92
    %v109 = vpack.c.bf16 %v95, %v94
    %v110 = vpack.c.bf16 %v97, %v96
    %v111 = vpack.c.bf16 %v99, %v98
    %v112 = vpack.c.bf16 %v101, %v100
    %v113 = vpack.c.bf16 %v103, %v102
    %v114 = vpack.c.bf16 %v105, %v104
    %v115 = vpack.c.bf16 %v107, %v106
    %v116 = vld [vmem:[#allocation6] sm:$0xf]
    %v117 = vld [vmem:[#allocation6 + $0x4] sm:$0xf]
    %v118 = vld [vmem:[#allocation6 + $0x8] sm:$0xf]
    %v119 = vld [vmem:[#allocation6 + $0xc] sm:$0xf]
    %v120 = vld [vmem:[#allocation6 + $0x10] sm:$0xf]
    %v121 = vld [vmem:[#allocation6 + $0x14] sm:$0xf]
    %v122 = vld [vmem:[#allocation6 + $0x18] sm:$0xf]
    %v123 = vld [vmem:[#allocation6 + $0x1c] sm:$0xf]
    %v124 = vld [vmem:[#allocation6 + $0x20] sm:$0xf]
    %v125 = vld [vmem:[#allocation6 + $0x24] sm:$0xf]
    %v126 = vld [vmem:[#allocation6 + $0x28] sm:$0xf]
    %v127 = vld [vmem:[#allocation6 + $0x2c] sm:$0xf]
    %v128 = vld [vmem:[#allocation6 + $0x30] sm:$0xf]
    %v129 = vld [vmem:[#allocation6 + $0x34] sm:$0xf]
    %v130 = vld [vmem:[#allocation6 + $0x38] sm:$0xf]
    %v131 = vld [vmem:[#allocation6 + $0x3c] sm:$0xf]
    %v148 = vunpack.c.l.b16 %v116
    %v149 = vunpack.c.l.b16 %v117
    %v150 = vunpack.c.l.b16 %v118
    %v151 = vunpack.c.l.b16 %v119
    %v152 = vunpack.c.l.b16 %v120
    %v153 = vunpack.c.l.b16 %v121
    %v154 = vunpack.c.l.b16 %v122
    %v155 = vunpack.c.l.b16 %v123
    %v156 = vunpack.c.l.b16 %v124
    %v157 = vunpack.c.l.b16 %v125
    %v158 = vunpack.c.l.b16 %v126
    %v159 = vunpack.c.l.b16 %v127
    %v160 = vunpack.c.l.b16 %v128
    %v161 = vunpack.c.l.b16 %v129
    %v162 = vunpack.c.l.b16 %v130
    %v163 = vunpack.c.l.b16 %v131
    %v164 = vpack.c.b16 %v149, %v148
    %v165 = vpack.c.b16 %v151, %v150
    %v166 = vpack.c.b16 %v153, %v152
    %v167 = vpack.c.b16 %v155, %v154
    %v168 = vpack.c.b16 %v157, %v156
    %v169 = vpack.c.b16 %v159, %v158
    %v170 = vpack.c.b16 %v161, %v160
    %v171 = vpack.c.b16 %v163, %v162
    %180 = vmatprep.subr.bf16.mxu0 0
    %181 = vmatpush1.bf16.msra.mxu0 %v164
    %182 = vmatprep.subr.bf16.mxu0 0
    %183 = vmatpush1.bf16.msra.mxu0 %v165
    %184 = vmatprep.subr.bf16.mxu0 0
    %185 = vmatpush1.bf16.msra.mxu0 %v166
    %186 = vmatprep.subr.bf16.mxu0 0
    %187 = vmatpush1.bf16.msra.mxu0 %v167
    %188 = vmatprep.subr.bf16.mxu0 0
    %189 = vmatpush1.bf16.msra.mxu0 %v168
    %190 = vmatprep.subr.bf16.mxu0 0
    %191 = vmatpush1.bf16.msra.mxu0 %v169
    %192 = vmatprep.subr.bf16.mxu0 0
    %193 = vmatpush1.bf16.msra.mxu0 %v170
    %194 = vmatprep.subr.bf16.mxu0 0
    %195 = vmatpush1.bf16.msra.mxu0 %v171
    %196 = vmatprep.subr.bf16.mxu0 0
    %197 = vmatpush1.bf16.msra.mxu0 0
    %198 = vmatprep.subr.bf16.mxu0 0
    %199 = vmatpush1.bf16.msra.mxu0 0
    %200 = vmatprep.subr.bf16.mxu0 0
    %201 = vmatpush1.bf16.msra.mxu0 0
    %202 = vmatprep.subr.bf16.mxu0 0
    %203 = vmatpush1.bf16.msra.mxu0 0
    %204 = vmatprep.subr.bf16.mxu0 0
    %205 = vmatpush1.bf16.msra.mxu0 0
    %206 = vmatprep.subr.bf16.mxu0 0
    %207 = vmatpush1.bf16.msra.mxu0 0
    %208 = vmatprep.subr.bf16.mxu0 0
    %209 = vmatpush1.bf16.msra.mxu0 0
    %210 = vmatprep.subr.bf16.mxu0 0
    %211 = vmatpush1.bf16.msra.mxu0 0
    %212 = vmatprep.mubr.bf16.mxu0 0
    %213 = vmatmul.mubr.bf16.gmra.mrb[0].mxu0 %v108
    %v214 = vpop.f32.mrb[0].mxu0
    %v215 = vadd.f32 0.0, %v214
    %v216 = vpop.f32.mrb[0].mxu0
    %v217 = vpop.f32.mrb[0].mxu0
    %v218 = vadd.f32 0.0, %v217
    %v219 = vpop.f32.mrb[0].mxu0
    %220 = vmatprep.mubr.bf16.mxu0 0
    %221 = vmatmul.mubr.bf16.gmra.mrb[0].mxu0 %v109
    %v222 = vpop.f32.mrb[0].mxu0
    %v223 = vadd.f32 0.0, %v222
    %v224 = vpop.f32.mrb[0].mxu0
    %v225 = vpop.f32.mrb[0].mxu0
    %v226 = vadd.f32 0.0, %v225
    %v227 = vpop.f32.mrb[0].mxu0
    %228 = vmatprep.mubr.bf16.mxu0 0
    %229 = vmatmul.mubr.bf16.gmra.mrb[0].mxu0 %v110
    %v230 = vpop.f32.mrb[0].mxu0
    %v231 = vadd.f32 0.0, %v230
    %v232 = vpop.f32.mrb[0].mxu0
    %v233 = vpop.f32.mrb[0].mxu0
    %v234 = vadd.f32 0.0, %v233
    %v235 = vpop.f32.mrb[0].mxu0
    %236 = vmatprep.mubr.bf16.mxu0 0
    %237 = vmatmul.mubr.bf16.gmra.mrb[0].mxu0 %v111
    %v238 = vpop.f32.mrb[0].mxu0
    %v239 = vadd.f32 0.0, %v238
    %v240 = vpop.f32.mrb[0].mxu0
    %v241 = vpop.f32.mrb[0].mxu0
    %v242 = vadd.f32 0.0, %v241
    %v243 = vpop.f32.mrb[0].mxu0
    %244 = vmatprep.mubr.bf16.mxu0 0
    %245 = vmatmul.mubr.bf16.gmra.mrb[0].mxu0 %v112
    %v246 = vpop.f32.mrb[0].mxu0
    %v247 = vadd.f32 0.0, %v246
    %v248 = vpop.f32.mrb[0].mxu0
    %v249 = vpop.f32.mrb[0].mxu0
    %v250 = vadd.f32 0.0, %v249
    %v251 = vpop.f32.mrb[0].mxu0
    %252 = vmatprep.mubr.bf16.mxu0 0
    %253 = vmatmul.mubr.bf16.gmra.mrb[0].mxu0 %v113
    %v254 = vpop.f32.mrb[0].mxu0
    %v255 = vadd.f32 0.0, %v254
    %v256 = vpop.f32.mrb[0].mxu0
    %v257 = vpop.f32.mrb[0].mxu0
    %v258 = vadd.f32 0.0, %v257
    %v259 = vpop.f32.mrb[0].mxu0
    %260 = vmatprep.mubr.bf16.mxu0 0
    %261 = vmatmul.mubr.bf16.gmra.mrb[0].mxu0 %v114
    %v262 = vpop.f32.mrb[0].mxu0
    %v263 = vadd.f32 0.0, %v262
    %v264 = vpop.f32.mrb[0].mxu0
    %v265 = vpop.f32.mrb[0].mxu0
    %v266 = vadd.f32 0.0, %v265
    %v267 = vpop.f32.mrb[0].mxu0
    %268 = vmatprep.mubr.bf16.mxu0 0
    %269 = vmatmul.mubr.bf16.gmra.mrb[0].mxu0 %v115
    %v270 = vpop.f32.mrb[0].mxu0
    %v271 = vadd.f32 0.0, %v270
    %v272 = vpop.f32.mrb[0].mxu0
    %v273 = vpop.f32.mrb[0].mxu0
    %v274 = vadd.f32 0.0, %v273
    %v275 = vpop.f32.mrb[0].mxu0
    %276 = vdwg.mxu0
    %v277 = vld [vmem:[%s4] sm:$0x1]
    %v278 = vld [vmem:[%s5] sm:$0x1]
    %v279 = vadd.f32 %v215, %v218
    %v280 = vadd.f32 %v279, %v223
    %v281 = vadd.f32 %v280, %v226
    %v282 = vadd.f32 %v281, %v231
    %v283 = vadd.f32 %v282, %v234
    %v284 = vadd.f32 %v283, %v239
    %v285 = vadd.f32 %v284, %v242
    %v286 = vadd.f32 %v285, %v247
    %v287 = vadd.f32 %v286, %v250
    %v288 = vadd.f32 %v287, %v255
    %v289 = vadd.f32 %v288, %v258
    %v290 = vadd.f32 %v289, %v263
    %v291 = vadd.f32 %v290, %v266
    %v292 = vadd.f32 %v291, %v271
    %v293 = vadd.f32 %v292, %v274
    %v294 = vrot.slane %v293, 4
    %v295 = vadd.f32 %v293, %v294
    %v296 = vrot.slane %v295, 2
    %v297 = vadd.f32 %v295, %v296
    %v298 = vrot.slane %v297, 1
    %v299 = vadd.f32 %v297, %v298
    %v300 = vmul.f32 %v215, %v215
    %v301 = vmul.f32 %v218, %v218
    %v302 = vmul.f32 %v223, %v223
    %v303 = vmul.f32 %v226, %v226
    %v304 = vmul.f32 %v231, %v231
    %v305 = vmul.f32 %v234, %v234
    %v306 = vmul.f32 %v239, %v239
    %v307 = vmul.f32 %v242, %v242
    %v308 = vmul.f32 %v247, %v247
    %v309 = vmul.f32 %v250, %v250
    %v310 = vmul.f32 %v255, %v255
    %v311 = vmul.f32 %v258, %v258
    %v312 = vmul.f32 %v263, %v263
    %v313 = vmul.f32 %v266, %v266
    %v314 = vmul.f32 %v271, %v271
    %v315 = vmul.f32 %v274, %v274
    %v316 = vadd.f32 %v300, %v301
    %v317 = vadd.f32 %v316, %v302
    %v318 = vadd.f32 %v317, %v303
    %v319 = vadd.f32 %v318, %v304
    %v320 = vadd.f32 %v319, %v305
    %v321 = vadd.f32 %v320, %v306
    %v322 = vadd.f32 %v321, %v307
    %v323 = vadd.f32 %v322, %v308
    %v324 = vadd.f32 %v323, %v309
    %v325 = vadd.f32 %v324, %v310
    %v326 = vadd.f32 %v325, %v311
    %v327 = vadd.f32 %v326, %v312
    %v328 = vadd.f32 %v327, %v313
    %v329 = vadd.f32 %v328, %v314
    %v330 = vadd.f32 %v329, %v315
    %v331 = vrot.slane %v330, 4
    %v332 = vadd.f32 %v330, %v331
    %v333 = vrot.slane %v332, 2
    %v334 = vadd.f32 %v332, %v333
    %v335 = vrot.slane %v334, 1
    %v336 = vadd.f32 %v334, %v335
    %v337 = vmul.f32 %v299, 0.0078125
    %v338 = vmul.f32 %v336, 0.0078125
    %v339 = vmul.f32 %v337, %v337
    %v340 = vsub.f32 %v338, %v339
    %v341 = vadd.f32 %v340, 1e-05
    %v342 = vrsqrt.pop %v341
    %v343 = vmul.f32 %v277, %v342
    %v344 = vmul.f32 %v337, %v343
    %v345 = vsub.f32 %v278, %v344
    %v347 = vlaneseq
    %v348 = vshrl.u32 %v347, 7
    %v349 = vsub.s32 0, %v348
    %v350 = vrot.slane %v343, %v349
    %v352 = vmul.f32 %v215, %v350
    %v353 = vmul.f32 %v218, %v350
    %v354 = vmul.f32 %v223, %v350
    %v355 = vmul.f32 %v226, %v350
    %v356 = vmul.f32 %v231, %v350
    %v357 = vmul.f32 %v234, %v350
    %v358 = vmul.f32 %v239, %v350
    %v359 = vmul.f32 %v242, %v350
    %v360 = vmul.f32 %v247, %v350
    %v361 = vmul.f32 %v250, %v350
    %v362 = vmul.f32 %v255, %v350
    %v363 = vmul.f32 %v258, %v350
    %v364 = vmul.f32 %v263, %v350
    %v365 = vmul.f32 %v266, %v350
    %v366 = vmul.f32 %v271, %v350
    %v367 = vmul.f32 %v274, %v350
    %v369 = vlaneseq
    %v370 = vshrl.u32 %v369, 7
    %v371 = vsub.s32 0, %v370
    %v372 = vrot.slane %v345, %v371
    %v374 = vadd.f32 %v352, %v372
    %v375 = vadd.f32 %v353, %v372
    %v376 = vadd.f32 %v354, %v372
    %v377 = vadd.f32 %v355, %v372
    %v378 = vadd.f32 %v356, %v372
    %v379 = vadd.f32 %v357, %v372
    %v380 = vadd.f32 %v358, %v372
    %v381 = vadd.f32 %v359, %v372
    %v382 = vadd.f32 %v360, %v372
    %v383 = vadd.f32 %v361, %v372
    %v384 = vadd.f32 %v362, %v372
    %v385 = vadd.f32 %v363, %v372
    %v386 = vadd.f32 %v364, %v372
    %v387 = vadd.f32 %v365, %v372
    %v388 = vadd.f32 %v366, %v372
    %v389 = vadd.f32 %v367, %v372
    %v390 = vmax.f32 %v374, 0.0
    %v391 = vmax.f32 %v375, 0.0
    %v392 = vmax.f32 %v376, 0.0
    %v393 = vmax.f32 %v377, 0.0
    %v394 = vmax.f32 %v378, 0.0
    %v395 = vmax.f32 %v379, 0.0
    %v396 = vmax.f32 %v380, 0.0
    %v397 = vmax.f32 %v381, 0.0
    %v398 = vmax.f32 %v382, 0.0
    %v399 = vmax.f32 %v383, 0.0
    %v400 = vmax.f32 %v384, 0.0
    %v401 = vmax.f32 %v385, 0.0
    %v402 = vmax.f32 %v386, 0.0
    %v403 = vmax.f32 %v387, 0.0
    %v404 = vmax.f32 %v388, 0.0
    %v405 = vmax.f32 %v389, 0.0
    %406 = vst [vmem:[#allocation2] sm:$0xff] 0.0
    %407 = vst [vmem:[#allocation2 + $0x8] sm:$0xff] 0.0
    %408 = vst [vmem:[#allocation2 + $0xa0] sm:$0xff] 0.0
    %409 = vst [vmem:[#allocation2 + $0xa8] sm:$0xff] 0.0
    %s410 = scalar_lea.vmem [#allocation2], 144
    %411 = vst [vmem:[%s410] sm:$0xff] 0.0
    %412 = vst [vmem:[%s410 + $0x8] sm:$0xff] 0.0
    %413 = vst [vmem:[%s410 + $0xa0] sm:$0xff] 0.0
    %414 = vst [vmem:[%s410 + $0xa8] sm:$0xff] 0.0
    %s415 = scalar_lea.vmem [#allocation2], 16
    %416 = vst [vmem:[%s415] sm:$0x1] 0.0
    %417 = vst [vmem:[%s415 + $0x10] sm:$0x1] 0.0
    %418 = vst [vmem:[%s415 + $0x20] sm:$0x1] 0.0
    %419 = vst [vmem:[%s415 + $0x30] sm:$0x1] 0.0
    %420 = vst [vmem:[%s415 + $0x40] sm:$0x1] 0.0
    %421 = vst [vmem:[%s415 + $0x50] sm:$0x1] 0.0
    %422 = vst [vmem:[%s415 + $0x60] sm:$0x1] 0.0
    %423 = vst [vmem:[%s415 + $0x70] sm:$0x1] 0.0
    %424 = vst [vmem:[%s415 + $0xa0] sm:$0x1] 0.0
    %425 = vst [vmem:[%s415 + $0xb0] sm:$0x1] 0.0
    %426 = vst [vmem:[%s415 + $0xc0] sm:$0x1] 0.0
    %427 = vst [vmem:[%s415 + $0xd0] sm:$0x1] 0.0
    %428 = vst [vmem:[%s415 + $0xe0] sm:$0x1] 0.0
    %429 = vst [vmem:[%s415 + $0xf0] sm:$0x1] 0.0
    %430 = vst [vmem:[%s415 + $0x100] sm:$0x1] 0.0
    %431 = vst [vmem:[%s415 + $0x110] sm:$0x1] 0.0
    %432 = vst [vmem:[%s415 + $0x9] sm:$0x1] 0.0
    %433 = vst [vmem:[%s415 + $0x19] sm:$0x1] 0.0
    %434 = vst [vmem:[%s415 + $0x29] sm:$0x1] 0.0
    %435 = vst [vmem:[%s415 + $0x39] sm:$0x1] 0.0
    %436 = vst [vmem:[%s415 + $0x49] sm:$0x1] 0.0
    %437 = vst [vmem:[%s415 + $0x59] sm:$0x1] 0.0
    %438 = vst [vmem:[%s415 + $0x69] sm:$0x1] 0.0
    %439 = vst [vmem:[%s415 + $0x79] sm:$0x1] 0.0
    %440 = vst [vmem:[%s415 + $0xa9] sm:$0x1] 0.0
    %441 = vst [vmem:[%s415 + $0xb9] sm:$0x1] 0.0
    %442 = vst [vmem:[%s415 + $0xc9] sm:$0x1] 0.0
    %443 = vst [vmem:[%s415 + $0xd9] sm:$0x1] 0.0
    %444 = vst [vmem:[%s415 + $0xe9] sm:$0x1] 0.0
    %445 = vst [vmem:[%s415 + $0xf9] sm:$0x1] 0.0
    %446 = vst [vmem:[%s415 + $0x109] sm:$0x1] 0.0
    %447 = vst [vmem:[%s415 + $0x119] sm:$0x1] 0.0
    %448 = vst [vmem:[%s415 + $0x1] sm:$0xff] %v390
    %449 = vst [vmem:[%s415 + $0x11] sm:$0xff] %v391
    %450 = vst [vmem:[%s415 + $0x21] sm:$0xff] %v392
    %451 = vst [vmem:[%s415 + $0x31] sm:$0xff] %v393
    %452 = vst [vmem:[%s415 + $0x41] sm:$0xff] %v394
    %453 = vst [vmem:[%s415 + $0x51] sm:$0xff] %v395
    %454 = vst [vmem:[%s415 + $0x61] sm:$0xff] %v396
    %455 = vst [vmem:[%s415 + $0x71] sm:$0xff] %v397
    %456 = vst [vmem:[%s415 + $0xa1] sm:$0xff] %v398
    %457 = vst [vmem:[%s415 + $0xb1] sm:$0xff] %v399
    %458 = vst [vmem:[%s415 + $0xc1] sm:$0xff] %v400
    %459 = vst [vmem:[%s415 + $0xd1] sm:$0xff] %v401
    %460 = vst [vmem:[%s415 + $0xe1] sm:$0xff] %v402
    %461 = vst [vmem:[%s415 + $0xf1] sm:$0xff] %v403
    %462 = vst [vmem:[%s415 + $0x101] sm:$0xff] %v404
    %463 = vst [vmem:[%s415 + $0x111] sm:$0xff] %v405
    %v464 = vld [vmem:[#allocation2] sm:$0xff]
    %v465 = vld [vmem:[#allocation2 + $0x8] sm:$0xff]
    %v466 = vld [vmem:[#allocation2 + $0x10] sm:$0xff]
    %v467 = vld [vmem:[#allocation2 + $0x18] sm:$0xff]
    %v468 = vld [vmem:[#allocation2 + $0x20] sm:$0xff]
    %v469 = vld [vmem:[#allocation2 + $0x28] sm:$0xff]
    %v470 = vld [vmem:[#allocation2 + $0x30] sm:$0xff]
    %v471 = vld [vmem:[#allocation2 + $0x38] sm:$0xff]
    %v472 = vld [vmem:[#allocation2 + $0x40] sm:$0xff]
    %v473 = vld [vmem:[#allocation2 + $0x48] sm:$0xff]
    %v474 = vld [vmem:[#allocation2 + $0x50] sm:$0xff]
    %v475 = vld [vmem:[#allocation2 + $0x58] sm:$0xff]
    %v476 = vld [vmem:[#allocation2 + $0x60] sm:$0xff]
    %v477 = vld [vmem:[#allocation2 + $0x68] sm:$0xff]
    %v478 = vld [vmem:[#allocation2 + $0x70] sm:$0xff]
    %v479 = vld [vmem:[#allocation2 + $0x78] sm:$0xff]
    %v480 = vld [vmem:[#allocation2 + $0x80] sm:$0xff]
    %v481 = vld [vmem:[#allocation2 + $0x88] sm:$0xff]
    %v482 = vld [vmem:[#allocation2 + $0x90] sm:$0xff]
    %v483 = vld [vmem:[#allocation2 + $0x98] sm:$0xff]
    %v484 = vld [vmem:[#allocation2 + $0xa0] sm:$0xff]
    %v485 = vld [vmem:[#allocation2 + $0xa8] sm:$0xff]
    %v486 = vld [vmem:[#allocation2 + $0xb0] sm:$0xff]
    %v487 = vld [vmem:[#allocation2 + $0xb8] sm:$0xff]
    %v488 = vld [vmem:[#allocation2 + $0xc0] sm:$0xff]
    %v489 = vld [vmem:[#allocation2 + $0xc8] sm:$0xff]
    %v490 = vld [vmem:[#allocation2 + $0xd0] sm:$0xff]
    %v491 = vld [vmem:[#allocation2 + $0xd8] sm:$0xff]
    %v492 = vld [vmem:[#allocation2 + $0xe0] sm:$0xff]
    %v493 = vld [vmem:[#allocation2 + $0xe8] sm:$0xff]
    %v494 = vld [vmem:[#allocation2 + $0xf0] sm:$0xff]
    %v495 = vld [vmem:[#allocation2 + $0xf8] sm:$0xff]
    %v496 = vld [vmem:[#allocation2 + $0x100] sm:$0xff]
    %v497 = vld [vmem:[#allocation2 + $0x108] sm:$0xff]
    %v498 = vld [vmem:[#allocation2 + $0x110] sm:$0xff]
    %v499 = vld [vmem:[#allocation2 + $0x118] sm:$0xff]
    %v500 = vld [vmem:[#allocation2 + $0x120] sm:$0xff]
    %v501 = vld [vmem:[#allocation2 + $0x128] sm:$0xff]
    %v502 = vld [vmem:[#allocation2 + $0x130] sm:$0xff]
    %v503 = vld [vmem:[#allocation2 + $0x138] sm:$0xff]
    %v504 = vpack.c.bf16 %v466, %v464
    %v505 = vpack.c.bf16 %v470, %v468
    %v506 = vpack.c.bf16 %v474, %v472
    %v507 = vpack.c.bf16 %v478, %v476
    %v508 = vpack.c.bf16 %v486, %v484
    %v509 = vpack.c.bf16 %v490, %v488
    %v510 = vpack.c.bf16 %v494, %v492
    %v511 = vpack.c.bf16 %v498, %v496
    %vm544 = vcmask 1046528
    %v545 = vrot.slane %v464, 1
    %v546 = vrot.slane %v465, 1
    %v547 = vsel %vm544, %v545, %v546
    %v548 = vrot.slane %v466, 1
    %v549 = vrot.slane %v467, 1
    %v550 = vsel %vm544, %v548, %v549
    %v551 = vrot.slane %v468, 1
    %v552 = vrot.slane %v469, 1
    %v553 = vsel %vm544, %v551, %v552
    %v554 = vrot.slane %v470, 1
    %v555 = vrot.slane %v471, 1
    %v556 = vsel %vm544, %v554, %v555
    %v557 = vrot.slane %v472, 1
    %v558 = vrot.slane %v473, 1
    %v559 = vsel %vm544, %v557, %v558
    %v560 = vrot.slane %v474, 1
    %v561 = vrot.slane %v475, 1
    %v562 = vsel %vm544, %v560, %v561
    %v563 = vrot.slane %v476, 1
    %v564 = vrot.slane %v477, 1
    %v565 = vsel %vm544, %v563, %v564
    %v566 = vrot.slane %v478, 1
    %v567 = vrot.slane %v479, 1
    %v568 = vsel %vm544, %v566, %v567
    %v569 = vrot.slane %v484, 1
    %v570 = vrot.slane %v485, 1
    %v571 = vsel %vm544, %v569, %v570
    %v572 = vrot.slane %v486, 1
    %v573 = vrot.slane %v487, 1
    %v574 = vsel %vm544, %v572, %v573
    %v575 = vrot.slane %v488, 1
    %v576 = vrot.slane %v489, 1
    %v577 = vsel %vm544, %v575, %v576
    %v578 = vrot.slane %v490, 1
    %v579 = vrot.slane %v491, 1
    %v580 = vsel %vm544, %v578, %v579
    %v581 = vrot.slane %v492, 1
    %v582 = vrot.slane %v493, 1
    %v583 = vsel %vm544, %v581, %v582
    %v584 = vrot.slane %v494, 1
    %v585 = vrot.slane %v495, 1
    %v586 = vsel %vm544, %v584, %v585
    %v587 = vrot.slane %v496, 1
    %v588 = vrot.slane %v497, 1
    %v589 = vsel %vm544, %v587, %v588
    %v590 = vrot.slane %v498, 1
    %v591 = vrot.slane %v499, 1
    %v592 = vsel %vm544, %v590, %v591
    %v609 = vpack.c.bf16 %v550, %v547
    %v610 = vpack.c.bf16 %v556, %v553
    %v611 = vpack.c.bf16 %v562, %v559
    %v612 = vpack.c.bf16 %v568, %v565
    %v613 = vpack.c.bf16 %v574, %v571
    %v614 = vpack.c.bf16 %v580, %v577
    %v615 = vpack.c.bf16 %v586, %v583
    %v616 = vpack.c.bf16 %v592, %v589
    %vm617 = vcmask 1045504
    %v618 = vrot.slane %v464, 2
    %v619 = vrot.slane %v465, 2
    %v620 = vsel %vm617, %v618, %v619
    %v621 = vrot.slane %v466, 2
    %v622 = vrot.slane %v467, 2
    %v623 = vsel %vm617, %v621, %v622
    %v624 = vrot.slane %v468, 2
    %v625 = vrot.slane %v469, 2
    %v626 = vsel %vm617, %v624, %v625
    %v627 = vrot.slane %v470, 2
    %v628 = vrot.slane %v471, 2
    %v629 = vsel %vm617, %v627, %v628
    %v630 = vrot.slane %v472, 2
    %v631 = vrot.slane %v473, 2
    %v632 = vsel %vm617, %v630, %v631
    %v633 = vrot.slane %v474, 2
    %v634 = vrot.slane %v475, 2
    %v635 = vsel %vm617, %v633, %v634
    %v636 = vrot.slane %v476, 2
    %v637 = vrot.slane %v477, 2
    %v638 = vsel %vm617, %v636, %v637
    %v639 = vrot.slane %v478, 2
    %v640 = vrot.slane %v479, 2
    %v641 = vsel %vm617, %v639, %v640
    %v642 = vrot.slane %v484, 2
    %v643 = vrot.slane %v485, 2
    %v644 = vsel %vm617, %v642, %v643
    %v645 = vrot.slane %v486, 2
    %v646 = vrot.slane %v487, 2
    %v647 = vsel %vm617, %v645, %v646
    %v648 = vrot.slane %v488, 2
    %v649 = vrot.slane %v489, 2
    %v650 = vsel %vm617, %v648, %v649
    %v651 = vrot.slane %v490, 2
    %v652 = vrot.slane %v491, 2
    %v653 = vsel %vm617, %v651, %v652
    %v654 = vrot.slane %v492, 2
    %v655 = vrot.slane %v493, 2
    %v656 = vsel %vm617, %v654, %v655
    %v657 = vrot.slane %v494, 2
    %v658 = vrot.slane %v495, 2
    %v659 = vsel %vm617, %v657, %v658
    %v660 = vrot.slane %v496, 2
    %v661 = vrot.slane %v497, 2
    %v662 = vsel %vm617, %v660, %v661
    %v663 = vrot.slane %v498, 2
    %v664 = vrot.slane %v499, 2
    %v665 = vsel %vm617, %v663, %v664
    %v682 = vpack.c.bf16 %v623, %v620
    %v683 = vpack.c.bf16 %v629, %v626
    %v684 = vpack.c.bf16 %v635, %v632
    %v685 = vpack.c.bf16 %v641, %v638
    %v686 = vpack.c.bf16 %v647, %v644
    %v687 = vpack.c.bf16 %v653, %v650
    %v688 = vpack.c.bf16 %v659, %v656
    %v689 = vpack.c.bf16 %v665, %v662
    %v690 = vpack.c.bf16 %v468, %v466
    %v691 = vpack.c.bf16 %v472, %v470
    %v692 = vpack.c.bf16 %v476, %v474
    %v693 = vpack.c.bf16 %v480, %v478
    %v694 = vpack.c.bf16 %v488, %v486
    %v695 = vpack.c.bf16 %v492, %v490
    %v696 = vpack.c.bf16 %v496, %v494
    %v697 = vpack.c.bf16 %v500, %v498
    %v702 = vrot.slane %v480, 1
    %v703 = vrot.slane %v481, 1
    %v704 = vsel %vm544, %v702, %v703
    %v705 = vrot.slane %v500, 1
    %v706 = vrot.slane %v501, 1
    %v707 = vsel %vm544, %v705, %v706
    %v710 = vpack.c.bf16 %v553, %v550
    %v711 = vpack.c.bf16 %v559, %v556
    %v712 = vpack.c.bf16 %v565, %v562
    %v713 = vpack.c.bf16 %v704, %v568
    %v714 = vpack.c.bf16 %v577, %v574
    %v715 = vpack.c.bf16 %v583, %v580
    %v716 = vpack.c.bf16 %v589, %v586
    %v717 = vpack.c.bf16 %v707, %v592
    %v718 = vrot.slane %v480, 2
    %v719 = vrot.slane %v481, 2
    %v720 = vsel %vm617, %v718, %v719
    %v721 = vrot.slane %v500, 2
    %v722 = vrot.slane %v501, 2
    %v723 = vsel %vm617, %v721, %v722
    %v726 = vpack.c.bf16 %v626, %v623
    %v727 = vpack.c.bf16 %v632, %v629
    %v728 = vpack.c.bf16 %v638, %v635
    %v729 = vpack.c.bf16 %v720, %v641
    %v730 = vpack.c.bf16 %v650, %v647
    %v731 = vpack.c.bf16 %v656, %v653
    %v732 = vpack.c.bf16 %v662, %v659
    %v733 = vpack.c.bf16 %v723, %v665
    %v734 = vpack.c.bf16 %v482, %v480
    %v735 = vpack.c.bf16 %v502, %v500
    %v740 = vrot.slane %v482, 1
    %v741 = vrot.slane %v483, 1
    %v742 = vsel %vm544, %v740, %v741
    %v743 = vrot.slane %v502, 1
    %v744 = vrot.slane %v503, 1
    %v745 = vsel %vm544, %v743, %v744
    %v748 = vpack.c.bf16 %v742, %v704
    %v749 = vpack.c.bf16 %v745, %v707
    %v750 = vrot.slane %v482, 2
    %v751 = vrot.slane %v483, 2
    %v752 = vsel %vm617, %v750, %v751
    %v753 = vrot.slane %v502, 2
    %v754 = vrot.slane %v503, 2
    %v755 = vsel %vm617, %v753, %v754
    %v758 = vpack.c.bf16 %v752, %v720
    %v759 = vpack.c.bf16 %v755, %v723
    %v760 = vld [vmem:[#allocation8] sm:$0xf]
    %v761 = vld [vmem:[#allocation8 + $0x4] sm:$0xf]
    %v762 = vld [vmem:[#allocation8 + $0x8] sm:$0xf]
    %v763 = vld [vmem:[#allocation8 + $0xc] sm:$0xf]
    %v764 = vld [vmem:[#allocation8 + $0x10] sm:$0xf]
    %v765 = vld [vmem:[#allocation8 + $0x14] sm:$0xf]
    %v766 = vld [vmem:[#allocation8 + $0x18] sm:$0xf]
    %v767 = vld [vmem:[#allocation8 + $0x1c] sm:$0xf]
    %v768 = vld [vmem:[#allocation8 + $0x20] sm:$0xf]
    %v769 = vld [vmem:[#allocation8 + $0x24] sm:$0xf]
    %v770 = vld [vmem:[#allocation8 + $0x28] sm:$0xf]
    %v771 = vld [vmem:[#allocation8 + $0x2c] sm:$0xf]
    %v772 = vld [vmem:[#allocation8 + $0x30] sm:$0xf]
    %v773 = vld [vmem:[#allocation8 + $0x34] sm:$0xf]
    %v774 = vld [vmem:[#allocation8 + $0x38] sm:$0xf]
    %v775 = vld [vmem:[#allocation8 + $0x3c] sm:$0xf]
    %v776 = vld [vmem:[#allocation8 + $0x40] sm:$0xf]
    %v777 = vld [vmem:[#allocation8 + $0x44] sm:$0xf]
    %v778 = vld [vmem:[#allocation8 + $0x48] sm:$0xf]
    %v779 = vld [vmem:[#allocation8 + $0x4c] sm:$0xf]
    %v780 = vld [vmem:[#allocation8 + $0x50] sm:$0xf]
    %v781 = vld [vmem:[#allocation8 + $0x54] sm:$0xf]
    %v782 = vld [vmem:[#allocation8 + $0x58] sm:$0xf]
    %v783 = vld [vmem:[#allocation8 + $0x5c] sm:$0xf]
    %v784 = vld [vmem:[#allocation8 + $0x60] sm:$0xf]
    %v785 = vld [vmem:[#allocation8 + $0x64] sm:$0xf]
    %v786 = vld [vmem:[#allocation8 + $0x68] sm:$0xf]
    %v787 = vld [vmem:[#allocation8 + $0x6c] sm:$0xf]
    %v788 = vld [vmem:[#allocation8 + $0x70] sm:$0xf]
    %v789 = vld [vmem:[#allocation8 + $0x74] sm:$0xf]
    %v790 = vld [vmem:[#allocation8 + $0x78] sm:$0xf]
    %v791 = vld [vmem:[#allocation8 + $0x7c] sm:$0xf]
    %v792 = vld [vmem:[#allocation8 + $0x80] sm:$0xf]
    %v793 = vld [vmem:[#allocation8 + $0x84] sm:$0xf]
    %v794 = vld [vmem:[#allocation8 + $0x88] sm:$0xf]
    %v795 = vld [vmem:[#allocation8 + $0x8c] sm:$0xf]
    %v796 = vld [vmem:[#allocation8 + $0x90] sm:$0xf]
    %v797 = vld [vmem:[#allocation8 + $0x94] sm:$0xf]
    %v798 = vld [vmem:[#allocation8 + $0x98] sm:$0xf]
    %v799 = vld [vmem:[#allocation8 + $0x9c] sm:$0xf]
    %v800 = vld [vmem:[#allocation8 + $0xa0] sm:$0xf]
    %v801 = vld [vmem:[#allocation8 + $0xa4] sm:$0xf]
    %v802 = vld [vmem:[#allocation8 + $0xa8] sm:$0xf]
    %v803 = vld [vmem:[#allocation8 + $0xac] sm:$0xf]
    %v804 = vld [vmem:[#allocation8 + $0xb0] sm:$0xf]
    %v805 = vld [vmem:[#allocation8 + $0xb4] sm:$0xf]
    %v806 = vld [vmem:[#allocation8 + $0xb8] sm:$0xf]
    %v807 = vld [vmem:[#allocation8 + $0xbc] sm:$0xf]
    %v808 = vld [vmem:[#allocation8 + $0xc0] sm:$0xf]
    %v809 = vld [vmem:[#allocation8 + $0xc4] sm:$0xf]
    %v810 = vld [vmem:[#allocation8 + $0xc8] sm:$0xf]
    %v811 = vld [vmem:[#allocation8 + $0xcc] sm:$0xf]
    %v812 = vld [vmem:[#allocation8 + $0xd0] sm:$0xf]
    %v813 = vld [vmem:[#allocation8 + $0xd4] sm:$0xf]
    %v814 = vld [vmem:[#allocation8 + $0xd8] sm:$0xf]
    %v815 = vld [vmem:[#allocation8 + $0xdc] sm:$0xf]
    %v816 = vld [vmem:[#allocation8 + $0xe0] sm:$0xf]
    %v817 = vld [vmem:[#allocation8 + $0xe4] sm:$0xf]
    %v818 = vld [vmem:[#allocation8 + $0xe8] sm:$0xf]
    %v819 = vld [vmem:[#allocation8 + $0xec] sm:$0xf]
    %v820 = vld [vmem:[#allocation8 + $0xf0] sm:$0xf]
    %v821 = vld [vmem:[#allocation8 + $0xf4] sm:$0xf]
    %v822 = vld [vmem:[#allocation8 + $0xf8] sm:$0xf]
    %v823 = vld [vmem:[#allocation8 + $0xfc] sm:$0xf]
    %v824 = vld [vmem:[#allocation8 + $0x100] sm:$0xf]
    %v825 = vld [vmem:[#allocation8 + $0x104] sm:$0xf]
    %v826 = vld [vmem:[#allocation8 + $0x108] sm:$0xf]
    %v827 = vld [vmem:[#allocation8 + $0x10c] sm:$0xf]
    %v828 = vld [vmem:[#allocation8 + $0x110] sm:$0xf]
    %v829 = vld [vmem:[#allocation8 + $0x114] sm:$0xf]
    %v830 = vld [vmem:[#allocation8 + $0x118] sm:$0xf]
    %v831 = vld [vmem:[#allocation8 + $0x11c] sm:$0xf]
    %v832 = vld [vmem:[#allocation8 + $0x120] sm:$0xf]
    %v833 = vld [vmem:[#allocation8 + $0x124] sm:$0xf]
    %v834 = vld [vmem:[#allocation8 + $0x128] sm:$0xf]
    %v835 = vld [vmem:[#allocation8 + $0x12c] sm:$0xf]
    %v836 = vld [vmem:[#allocation8 + $0x130] sm:$0xf]
    %v837 = vld [vmem:[#allocation8 + $0x134] sm:$0xf]
    %v838 = vld [vmem:[#allocation8 + $0x138] sm:$0xf]
    %v839 = vld [vmem:[#allocation8 + $0x13c] sm:$0xf]
    %v840 = vld [vmem:[#allocation8 + $0x140] sm:$0xf]
    %v841 = vld [vmem:[#allocation8 + $0x144] sm:$0xf]
    %v842 = vld [vmem:[#allocation8 + $0x148] sm:$0xf]
    %v843 = vld [vmem:[#allocation8 + $0x14c] sm:$0xf]
    %v844 = vld [vmem:[#allocation8 + $0x150] sm:$0xf]
    %v845 = vld [vmem:[#allocation8 + $0x154] sm:$0xf]
    %v846 = vld [vmem:[#allocation8 + $0x158] sm:$0xf]
    %v847 = vld [vmem:[#allocation8 + $0x15c] sm:$0xf]
    %v848 = vld [vmem:[#allocation8 + $0x160] sm:$0xf]
    %v849 = vld [vmem:[#allocation8 + $0x164] sm:$0xf]
    %v850 = vld [vmem:[#allocation8 + $0x168] sm:$0xf]
    %v851 = vld [vmem:[#allocation8 + $0x16c] sm:$0xf]
    %v852 = vld [vmem:[#allocation8 + $0x170] sm:$0xf]
    %v853 = vld [vmem:[#allocation8 + $0x174] sm:$0xf]
    %v854 = vld [vmem:[#allocation8 + $0x178] sm:$0xf]
    %v855 = vld [vmem:[#allocation8 + $0x17c] sm:$0xf]
    %v856 = vld [vmem:[#allocation8 + $0x180] sm:$0xf]
    %v857 = vld [vmem:[#allocation8 + $0x184] sm:$0xf]
    %v858 = vld [vmem:[#allocation8 + $0x188] sm:$0xf]
    %v859 = vld [vmem:[#allocation8 + $0x18c] sm:$0xf]
    %v860 = vld [vmem:[#allocation8 + $0x190] sm:$0xf]
    %v861 = vld [vmem:[#allocation8 + $0x194] sm:$0xf]
    %v862 = vld [vmem:[#allocation8 + $0x198] sm:$0xf]
    %v863 = vld [vmem:[#allocation8 + $0x19c] sm:$0xf]
    %v864 = vld [vmem:[#allocation8 + $0x1a0] sm:$0xf]
    %v865 = vld [vmem:[#allocation8 + $0x1a4] sm:$0xf]
    %v866 = vld [vmem:[#allocation8 + $0x1a8] sm:$0xf]
    %v867 = vld [vmem:[#allocation8 + $0x1ac] sm:$0xf]
    %v868 = vld [vmem:[#allocation8 + $0x1b0] sm:$0xf]
    %v869 = vld [vmem:[#allocation8 + $0x1b4] sm:$0xf]
    %v870 = vld [vmem:[#allocation8 + $0x1b8] sm:$0xf]
    %v871 = vld [vmem:[#allocation8 + $0x1bc] sm:$0xf]
    %v872 = vld [vmem:[#allocation8 + $0x1c0] sm:$0xf]
    %v873 = vld [vmem:[#allocation8 + $0x1c4] sm:$0xf]
    %v874 = vld [vmem:[#allocation8 + $0x1c8] sm:$0xf]
    %v875 = vld [vmem:[#allocation8 + $0x1cc] sm:$0xf]
    %v876 = vld [vmem:[#allocation8 + $0x1d0] sm:$0xf]
    %v877 = vld [vmem:[#allocation8 + $0x1d4] sm:$0xf]
    %v878 = vld [vmem:[#allocation8 + $0x1d8] sm:$0xf]
    %v879 = vld [vmem:[#allocation8 + $0x1dc] sm:$0xf]
    %v880 = vld [vmem:[#allocation8 + $0x1e0] sm:$0xf]
    %v881 = vld [vmem:[#allocation8 + $0x1e4] sm:$0xf]
    %v882 = vld [vmem:[#allocation8 + $0x1e8] sm:$0xf]
    %v883 = vld [vmem:[#allocation8 + $0x1ec] sm:$0xf]
    %v884 = vld [vmem:[#allocation8 + $0x1f0] sm:$0xf]
    %v885 = vld [vmem:[#allocation8 + $0x1f4] sm:$0xf]
    %v886 = vld [vmem:[#allocation8 + $0x1f8] sm:$0xf]
    %v887 = vld [vmem:[#allocation8 + $0x1fc] sm:$0xf]
    %v888 = vld [vmem:[#allocation8 + $0x200] sm:$0xf]
    %v889 = vld [vmem:[#allocation8 + $0x204] sm:$0xf]
    %v890 = vld [vmem:[#allocation8 + $0x208] sm:$0xf]
    %v891 = vld [vmem:[#allocation8 + $0x20c] sm:$0xf]
    %v892 = vld [vmem:[#allocation8 + $0x210] sm:$0xf]
    %v893 = vld [vmem:[#allocation8 + $0x214] sm:$0xf]
    %v894 = vld [vmem:[#allocation8 + $0x218] sm:$0xf]
    %v895 = vld [vmem:[#allocation8 + $0x21c] sm:$0xf]
    %v896 = vld [vmem:[#allocation8 + $0x220] sm:$0xf]
    %v897 = vld [vmem:[#allocation8 + $0x224] sm:$0xf]
    %v898 = vld [vmem:[#allocation8 + $0x228] sm:$0xf]
    %v899 = vld [vmem:[#allocation8 + $0x22c] sm:$0xf]
    %v900 = vld [vmem:[#allocation8 + $0x230] sm:$0xf]
    %v901 = vld [vmem:[#allocation8 + $0x234] sm:$0xf]
    %v902 = vld [vmem:[#allocation8 + $0x238] sm:$0xf]
    %v903 = vld [vmem:[#allocation8 + $0x23c] sm:$0xf]
    %v1048 = vunpack.c.l.b16 %v760
    %v1049 = vunpack.c.l.b16 %v761
    %v1050 = vunpack.c.l.b16 %v762
    %v1051 = vunpack.c.l.b16 %v763
    %v1052 = vunpack.c.l.b16 %v764
    %v1053 = vunpack.c.l.b16 %v765
    %v1054 = vunpack.c.l.b16 %v766
    %v1055 = vunpack.c.l.b16 %v767
    %v1056 = vunpack.c.l.b16 %v768
    %v1057 = vunpack.c.l.b16 %v769
    %v1058 = vunpack.c.l.b16 %v770
    %v1059 = vunpack.c.l.b16 %v771
    %v1060 = vunpack.c.l.b16 %v772
    %v1061 = vunpack.c.l.b16 %v773
    %v1062 = vunpack.c.l.b16 %v774
    %v1063 = vunpack.c.l.b16 %v775
    %v1064 = vunpack.c.l.b16 %v776
    %v1065 = vunpack.c.l.b16 %v777
    %v1066 = vunpack.c.l.b16 %v778
    %v1067 = vunpack.c.l.b16 %v779
    %v1068 = vunpack.c.l.b16 %v780
    %v1069 = vunpack.c.l.b16 %v781
    %v1070 = vunpack.c.l.b16 %v782
    %v1071 = vunpack.c.l.b16 %v783
    %v1072 = vunpack.c.l.b16 %v784
    %v1073 = vunpack.c.l.b16 %v785
    %v1074 = vunpack.c.l.b16 %v786
    %v1075 = vunpack.c.l.b16 %v787
    %v1076 = vunpack.c.l.b16 %v788
    %v1077 = vunpack.c.l.b16 %v789
    %v1078 = vunpack.c.l.b16 %v790
    %v1079 = vunpack.c.l.b16 %v791
    %v1080 = vunpack.c.l.b16 %v792
    %v1081 = vunpack.c.l.b16 %v793
    %v1082 = vunpack.c.l.b16 %v794
    %v1083 = vunpack.c.l.b16 %v795
    %v1084 = vunpack.c.l.b16 %v796
    %v1085 = vunpack.c.l.b16 %v797
    %v1086 = vunpack.c.l.b16 %v798
    %v1087 = vunpack.c.l.b16 %v799
    %v1088 = vunpack.c.l.b16 %v800
    %v1089 = vunpack.c.l.b16 %v801
    %v1090 = vunpack.c.l.b16 %v802
    %v1091 = vunpack.c.l.b16 %v803
    %v1092 = vunpack.c.l.b16 %v804
    %v1093 = vunpack.c.l.b16 %v805
    %v1094 = vunpack.c.l.b16 %v806
    %v1095 = vunpack.c.l.b16 %v807
    %v1096 = vunpack.c.l.b16 %v808
    %v1097 = vunpack.c.l.b16 %v809
    %v1098 = vunpack.c.l.b16 %v810
    %v1099 = vunpack.c.l.b16 %v811
    %v1100 = vunpack.c.l.b16 %v812
    %v1101 = vunpack.c.l.b16 %v813
    %v1102 = vunpack.c.l.b16 %v814
    %v1103 = vunpack.c.l.b16 %v815
    %v1104 = vunpack.c.l.b16 %v816
    %v1105 = vunpack.c.l.b16 %v817
    %v1106 = vunpack.c.l.b16 %v818
    %v1107 = vunpack.c.l.b16 %v819
    %v1108 = vunpack.c.l.b16 %v820
    %v1109 = vunpack.c.l.b16 %v821
    %v1110 = vunpack.c.l.b16 %v822
    %v1111 = vunpack.c.l.b16 %v823
    %v1112 = vunpack.c.l.b16 %v824
    %v1113 = vunpack.c.l.b16 %v825
    %v1114 = vunpack.c.l.b16 %v826
    %v1115 = vunpack.c.l.b16 %v827
    %v1116 = vunpack.c.l.b16 %v828
    %v1117 = vunpack.c.l.b16 %v829
    %v1118 = vunpack.c.l.b16 %v830
    %v1119 = vunpack.c.l.b16 %v831
    %v1120 = vunpack.c.l.b16 %v832
    %v1121 = vunpack.c.l.b16 %v833
    %v1122 = vunpack.c.l.b16 %v834
    %v1123 = vunpack.c.l.b16 %v835
    %v1124 = vunpack.c.l.b16 %v836
    %v1125 = vunpack.c.l.b16 %v837
    %v1126 = vunpack.c.l.b16 %v838
    %v1127 = vunpack.c.l.b16 %v839
    %v1128 = vunpack.c.l.b16 %v840
    %v1129 = vunpack.c.l.b16 %v841
    %v1130 = vunpack.c.l.b16 %v842
    %v1131 = vunpack.c.l.b16 %v843
    %v1132 = vunpack.c.l.b16 %v844
    %v1133 = vunpack.c.l.b16 %v845
    %v1134 = vunpack.c.l.b16 %v846
    %v1135 = vunpack.c.l.b16 %v847
    %v1136 = vunpack.c.l.b16 %v848
    %v1137 = vunpack.c.l.b16 %v849
    %v1138 = vunpack.c.l.b16 %v850
    %v1139 = vunpack.c.l.b16 %v851
    %v1140 = vunpack.c.l.b16 %v852
    %v1141 = vunpack.c.l.b16 %v853
    %v1142 = vunpack.c.l.b16 %v854
    %v1143 = vunpack.c.l.b16 %v855
    %v1144 = vunpack.c.l.b16 %v856
    %v1145 = vunpack.c.l.b16 %v857
    %v1146 = vunpack.c.l.b16 %v858
    %v1147 = vunpack.c.l.b16 %v859
    %v1148 = vunpack.c.l.b16 %v860
    %v1149 = vunpack.c.l.b16 %v861
    %v1150 = vunpack.c.l.b16 %v862
    %v1151 = vunpack.c.l.b16 %v863
    %v1152 = vunpack.c.l.b16 %v864
    %v1153 = vunpack.c.l.b16 %v865
    %v1154 = vunpack.c.l.b16 %v866
    %v1155 = vunpack.c.l.b16 %v867
    %v1156 = vunpack.c.l.b16 %v868
    %v1157 = vunpack.c.l.b16 %v869
    %v1158 = vunpack.c.l.b16 %v870
    %v1159 = vunpack.c.l.b16 %v871
    %v1160 = vunpack.c.l.b16 %v872
    %v1161 = vunpack.c.l.b16 %v873
    %v1162 = vunpack.c.l.b16 %v874
    %v1163 = vunpack.c.l.b16 %v875
    %v1164 = vunpack.c.l.b16 %v876
    %v1165 = vunpack.c.l.b16 %v877
    %v1166 = vunpack.c.l.b16 %v878
    %v1167 = vunpack.c.l.b16 %v879
    %v1168 = vunpack.c.l.b16 %v880
    %v1169 = vunpack.c.l.b16 %v881
    %v1170 = vunpack.c.l.b16 %v882
    %v1171 = vunpack.c.l.b16 %v883
    %v1172 = vunpack.c.l.b16 %v884
    %v1173 = vunpack.c.l.b16 %v885
    %v1174 = vunpack.c.l.b16 %v886
    %v1175 = vunpack.c.l.b16 %v887
    %v1176 = vunpack.c.l.b16 %v888
    %v1177 = vunpack.c.l.b16 %v889
    %v1178 = vunpack.c.l.b16 %v890
    %v1179 = vunpack.c.l.b16 %v891
    %v1180 = vunpack.c.l.b16 %v892
    %v1181 = vunpack.c.l.b16 %v893
    %v1182 = vunpack.c.l.b16 %v894
    %v1183 = vunpack.c.l.b16 %v895
    %v1184 = vunpack.c.l.b16 %v896
    %v1185 = vunpack.c.l.b16 %v897
    %v1186 = vunpack.c.l.b16 %v898
    %v1187 = vunpack.c.l.b16 %v899
    %v1188 = vunpack.c.l.b16 %v900
    %v1189 = vunpack.c.l.b16 %v901
    %v1190 = vunpack.c.l.b16 %v902
    %v1191 = vunpack.c.l.b16 %v903
    %v1192 = vpack.c.b16 %v1049, %v1048
    %v1193 = vpack.c.b16 %v1051, %v1050
    %v1194 = vpack.c.b16 %v1053, %v1052
    %v1195 = vpack.c.b16 %v1055, %v1054
    %v1196 = vpack.c.b16 %v1057, %v1056
    %v1197 = vpack.c.b16 %v1059, %v1058
    %v1198 = vpack.c.b16 %v1061, %v1060
    %v1199 = vpack.c.b16 %v1063, %v1062
    %v1200 = vpack.c.b16 %v1065, %v1064
    %v1201 = vpack.c.b16 %v1067, %v1066
    %v1202 = vpack.c.b16 %v1069, %v1068
    %v1203 = vpack.c.b16 %v1071, %v1070
    %v1204 = vpack.c.b16 %v1073, %v1072
    %v1205 = vpack.c.b16 %v1075, %v1074
    %v1206 = vpack.c.b16 %v1077, %v1076
    %v1207 = vpack.c.b16 %v1079, %v1078
    %v1208 = vpack.c.b16 %v1081, %v1080
    %v1209 = vpack.c.b16 %v1083, %v1082
    %v1210 = vpack.c.b16 %v1085, %v1084
    %v1211 = vpack.c.b16 %v1087, %v1086
    %v1212 = vpack.c.b16 %v1089, %v1088
    %v1213 = vpack.c.b16 %v1091, %v1090
    %v1214 = vpack.c.b16 %v1093, %v1092
    %v1215 = vpack.c.b16 %v1095, %v1094
    %v1216 = vpack.c.b16 %v1097, %v1096
    %v1217 = vpack.c.b16 %v1099, %v1098
    %v1218 = vpack.c.b16 %v1101, %v1100
    %v1219 = vpack.c.b16 %v1103, %v1102
    %v1220 = vpack.c.b16 %v1105, %v1104
    %v1221 = vpack.c.b16 %v1107, %v1106
    %v1222 = vpack.c.b16 %v1109, %v1108
    %v1223 = vpack.c.b16 %v1111, %v1110
    %v1224 = vpack.c.b16 %v1113, %v1112
    %v1225 = vpack.c.b16 %v1115, %v1114
    %v1226 = vpack.c.b16 %v1117, %v1116
    %v1227 = vpack.c.b16 %v1119, %v1118
    %v1228 = vpack.c.b16 %v1121, %v1120
    %v1229 = vpack.c.b16 %v1123, %v1122
    %v1230 = vpack.c.b16 %v1125, %v1124
    %v1231 = vpack.c.b16 %v1127, %v1126
    %v1232 = vpack.c.b16 %v1129, %v1128
    %v1233 = vpack.c.b16 %v1131, %v1130
    %v1234 = vpack.c.b16 %v1133, %v1132
    %v1235 = vpack.c.b16 %v1135, %v1134
    %v1236 = vpack.c.b16 %v1137, %v1136
    %v1237 = vpack.c.b16 %v1139, %v1138
    %v1238 = vpack.c.b16 %v1141, %v1140
    %v1239 = vpack.c.b16 %v1143, %v1142
    %v1240 = vpack.c.b16 %v1145, %v1144
    %v1241 = vpack.c.b16 %v1147, %v1146
    %v1242 = vpack.c.b16 %v1149, %v1148
    %v1243 = vpack.c.b16 %v1151, %v1150
    %v1244 = vpack.c.b16 %v1153, %v1152
    %v1245 = vpack.c.b16 %v1155, %v1154
    %v1246 = vpack.c.b16 %v1157, %v1156
    %v1247 = vpack.c.b16 %v1159, %v1158
    %v1248 = vpack.c.b16 %v1161, %v1160
    %v1249 = vpack.c.b16 %v1163, %v1162
    %v1250 = vpack.c.b16 %v1165, %v1164
    %v1251 = vpack.c.b16 %v1167, %v1166
    %v1252 = vpack.c.b16 %v1169, %v1168
    %v1253 = vpack.c.b16 %v1171, %v1170
    %v1254 = vpack.c.b16 %v1173, %v1172
    %v1255 = vpack.c.b16 %v1175, %v1174
    %v1256 = vpack.c.b16 %v1177, %v1176
    %v1257 = vpack.c.b16 %v1179, %v1178
    %v1258 = vpack.c.b16 %v1181, %v1180
    %v1259 = vpack.c.b16 %v1183, %v1182
    %v1260 = vpack.c.b16 %v1185, %v1184
    %v1261 = vpack.c.b16 %v1187, %v1186
    %v1262 = vpack.c.b16 %v1189, %v1188
    %v1263 = vpack.c.b16 %v1191, %v1190
    %1336 = vmatprep.subr.bf16.mxu0 0
    %1337 = vmatpush1.bf16.msra.mxu0 %v1192
    %1338 = vmatprep.subr.bf16.mxu0 0
    %1339 = vmatpush1.bf16.msra.mxu0 %v1193
    %1340 = vmatprep.subr.bf16.mxu0 0
    %1341 = vmatpush1.bf16.msra.mxu0 %v1194
    %1342 = vmatprep.subr.bf16.mxu0 0
    %1343 = vmatpush1.bf16.msra.mxu0 %v1195
    %1344 = vmatprep.subr.bf16.mxu0 0
    %1345 = vmatpush1.bf16.msra.mxu0 %v1196
    %1346 = vmatprep.subr.bf16.mxu0 0
    %1347 = vmatpush1.bf16.msra.mxu0 %v1197
    %1348 = vmatprep.subr.bf16.mxu0 0
    %1349 = vmatpush1.bf16.msra.mxu0 %v1198
    %1350 = vmatprep.subr.bf16.mxu0 0
    %1351 = vmatpush1.bf16.msra.mxu0 %v1199
    %1352 = vmatprep.subr.bf16.mxu0 0
    %1353 = vmatpush1.bf16.msra.mxu0 %v1200
    %1354 = vmatprep.subr.bf16.mxu0 0
    %1355 = vmatpush1.bf16.msra.mxu0 %v1201
    %1356 = vmatprep.subr.bf16.mxu0 0
    %1357 = vmatpush1.bf16.msra.mxu0 %v1202
    %1358 = vmatprep.subr.bf16.mxu0 0
    %1359 = vmatpush1.bf16.msra.mxu0 %v1203
    %1360 = vmatprep.subr.bf16.mxu0 0
    %1361 = vmatpush1.bf16.msra.mxu0 %v1204
    %1362 = vmatprep.subr.bf16.mxu0 0
    %1363 = vmatpush1.bf16.msra.mxu0 %v1205
    %1364 = vmatprep.subr.bf16.mxu0 0
    %1365 = vmatpush1.bf16.msra.mxu0 %v1206
    %1366 = vmatprep.subr.bf16.mxu0 0
    %1367 = vmatpush1.bf16.msra.mxu0 %v1207
    %1368 = vmatprep.mubr.bf16.mxu0 %v609
    %1369 = vmatmul.mubr.bf16.gmra.mrb[0].mxu0 %v504
    %v1370 = vpop.f32.mrb[0].mxu0
    %v1371 = vadd.f32 0.0, %v1370
    %v1372 = vpop.f32.mrb[0].mxu0
    %v1373 = vpop.f32.mrb[0].mxu0
    %v1374 = vadd.f32 0.0, %v1373
    %v1375 = vpop.f32.mrb[0].mxu0
    %1376 = vmatprep.mubr.bf16.mxu0 %v610
    %1377 = vmatmul.mubr.bf16.gmra.mrb[0].mxu0 %v505
    %v1378 = vpop.f32.mrb[0].mxu0
    %v1379 = vadd.f32 0.0, %v1378
    %v1380 = vpop.f32.mrb[0].mxu0
    %v1381 = vpop.f32.mrb[0].mxu0
    %v1382 = vadd.f32 0.0, %v1381
    %v1383 = vpop.f32.mrb[0].mxu0
    %1384 = vmatprep.mubr.bf16.mxu0 %v611
    %1385 = vmatmul.mubr.bf16.gmra.mrb[0].mxu0 %v506
    %v1386 = vpop.f32.mrb[0].mxu0
    %v1387 = vadd.f32 0.0, %v1386
    %v1388 = vpop.f32.mrb[0].mxu0
    %v1389 = vpop.f32.mrb[0].mxu0
    %v1390 = vadd.f32 0.0, %v1389
    %v1391 = vpop.f32.mrb[0].mxu0
    %1392 = vmatprep.mubr.bf16.mxu0 %v612
    %1393 = vmatmul.mubr.bf16.gmra.mrb[0].mxu0 %v507
    %v1394 = vpop.f32.mrb[0].mxu0
    %v1395 = vadd.f32 0.0, %v1394
    %v1396 = vpop.f32.mrb[0].mxu0
    %v1397 = vpop.f32.mrb[0].mxu0
    %v1398 = vadd.f32 0.0, %v1397
    %v1399 = vpop.f32.mrb[0].mxu0
    %1400 = vmatprep.mubr.bf16.mxu0 %v613
    %1401 = vmatmul.mubr.bf16.gmra.mrb[0].mxu0 %v508
    %v1402 = vpop.f32.mrb[0].mxu0
    %v1403 = vadd.f32 0.0, %v1402
    %v1404 = vpop.f32.mrb[0].mxu0
    %v1405 = vpop.f32.mrb[0].mxu0
    %v1406 = vadd.f32 0.0, %v1405
    %v1407 = vpop.f32.mrb[0].mxu0
    %1408 = vmatprep.mubr.bf16.mxu0 %v614
    %1409 = vmatmul.mubr.bf16.gmra.mrb[0].mxu0 %v509
    %v1410 = vpop.f32.mrb[0].mxu0
    %v1411 = vadd.f32 0.0, %v1410
    %v1412 = vpop.f32.mrb[0].mxu0
    %v1413 = vpop.f32.mrb[0].mxu0
    %v1414 = vadd.f32 0.0, %v1413
    %v1415 = vpop.f32.mrb[0].mxu0
    %1416 = vmatprep.mubr.bf16.mxu0 %v615
    %1417 = vmatmul.mubr.bf16.gmra.mrb[0].mxu0 %v510
    %v1418 = vpop.f32.mrb[0].mxu0
    %v1419 = vadd.f32 0.0, %v1418
    %v1420 = vpop.f32.mrb[0].mxu0
    %v1421 = vpop.f32.mrb[0].mxu0
    %v1422 = vadd.f32 0.0, %v1421
    %v1423 = vpop.f32.mrb[0].mxu0
    %1424 = vmatprep.mubr.bf16.mxu0 %v616
    %1425 = vmatmul.mubr.bf16.gmra.mrb[0].mxu0 %v511
    %v1426 = vpop.f32.mrb[0].mxu0
    %v1427 = vadd.f32 0.0, %v1426
    %v1428 = vpop.f32.mrb[0].mxu0
    %v1429 = vpop.f32.mrb[0].mxu0
    %v1430 = vadd.f32 0.0, %v1429
    %v1431 = vpop.f32.mrb[0].mxu0
    %1432 = vdwg.mxu0
    %1433 = vmatprep.subr.bf16.mxu0 0
    %1434 = vmatpush1.bf16.msra.mxu0 %v1208
    %1435 = vmatprep.subr.bf16.mxu0 0
    %1436 = vmatpush1.bf16.msra.mxu0 %v1209
    %1437 = vmatprep.subr.bf16.mxu0 0
    %1438 = vmatpush1.bf16.msra.mxu0 %v1210
    %1439 = vmatprep.subr.bf16.mxu0 0
    %1440 = vmatpush1.bf16.msra.mxu0 %v1211
    %1441 = vmatprep.subr.bf16.mxu0 0
    %1442 = vmatpush1.bf16.msra.mxu0 %v1212
    %1443 = vmatprep.subr.bf16.mxu0 0
    %1444 = vmatpush1.bf16.msra.mxu0 %v1213
    %1445 = vmatprep.subr.bf16.mxu0 0
    %1446 = vmatpush1.bf16.msra.mxu0 %v1214
    %1447 = vmatprep.subr.bf16.mxu0 0
    %1448 = vmatpush1.bf16.msra.mxu0 %v1215
    %1449 = vmatprep.subr.bf16.mxu0 0
    %1450 = vmatpush1.bf16.msra.mxu0 %v1216
    %1451 = vmatprep.subr.bf16.mxu0 0
    %1452 = vmatpush1.bf16.msra.mxu0 %v1217
    %1453 = vmatprep.subr.bf16.mxu0 0
    %1454 = vmatpush1.bf16.msra.mxu0 %v1218
    %1455 = vmatprep.subr.bf16.mxu0 0
    %1456 = vmatpush1.bf16.msra.mxu0 %v1219
    %1457 = vmatprep.subr.bf16.mxu0 0
    %1458 = vmatpush1.bf16.msra.mxu0 %v1220
    %1459 = vmatprep.subr.bf16.mxu0 0
    %1460 = vmatpush1.bf16.msra.mxu0 %v1221
    %1461 = vmatprep.subr.bf16.mxu0 0
    %1462 = vmatpush1.bf16.msra.mxu0 %v1222
    %1463 = vmatprep.subr.bf16.mxu0 0
    %1464 = vmatpush1.bf16.msra.mxu0 %v1223
    %1465 = vmatprep.mubr.bf16.mxu0 %v690
    %1466 = vmatmul.mubr.bf16.gmra.mrb[0].mxu0 %v682
    %v1467 = vpop.f32.mrb[0].mxu0
    %v1468 = vadd.f32 %v1371, %v1467
    %v1469 = vpop.f32.mrb[0].mxu0
    %v1470 = vpop.f32.mrb[0].mxu0
    %v1471 = vadd.f32 %v1374, %v1470
    %v1472 = vpop.f32.mrb[0].mxu0
    %1473 = vmatprep.mubr.bf16.mxu0 %v691
    %1474 = vmatmul.mubr.bf16.gmra.mrb[0].mxu0 %v683
    %v1475 = vpop.f32.mrb[0].mxu0
    %v1476 = vadd.f32 %v1379, %v1475
    %v1477 = vpop.f32.mrb[0].mxu0
    %v1478 = vpop.f32.mrb[0].mxu0
    %v1479 = vadd.f32 %v1382, %v1478
    %v1480 = vpop.f32.mrb[0].mxu0
    %1481 = vmatprep.mubr.bf16.mxu0 %v692
    %1482 = vmatmul.mubr.bf16.gmra.mrb[0].mxu0 %v684
    %v1483 = vpop.f32.mrb[0].mxu0
    %v1484 = vadd.f32 %v1387, %v1483
    %v1485 = vpop.f32.mrb[0].mxu0
    %v1486 = vpop.f32.mrb[0].mxu0
    %v1487 = vadd.f32 %v1390, %v1486
    %v1488 = vpop.f32.mrb[0].mxu0
    %1489 = vmatprep.mubr.bf16.mxu0 %v693
    %1490 = vmatmul.mubr.bf16.gmra.mrb[0].mxu0 %v685
    %v1491 = vpop.f32.mrb[0].mxu0
    %v1492 = vadd.f32 %v1395, %v1491
    %v1493 = vpop.f32.mrb[0].mxu0
    %v1494 = vpop.f32.mrb[0].mxu0
    %v1495 = vadd.f32 %v1398, %v1494
    %v1496 = vpop.f32.mrb[0].mxu0
    %1497 = vmatprep.mubr.bf16.mxu0 %v694
    %1498 = vmatmul.mubr.bf16.gmra.mrb[0].mxu0 %v686
    %v1499 = vpop.f32.mrb[0].mxu0
    %v1500 = vadd.f32 %v1403, %v1499
    %v1501 = vpop.f32.mrb[0].mxu0
    %v1502 = vpop.f32.mrb[0].mxu0
    %v1503 = vadd.f32 %v1406, %v1502
    %v1504 = vpop.f32.mrb[0].mxu0
    %1505 = vmatprep.mubr.bf16.mxu0 %v695
    %1506 = vmatmul.mubr.bf16.gmra.mrb[0].mxu0 %v687
    %v1507 = vpop.f32.mrb[0].mxu0
    %v1508 = vadd.f32 %v1411, %v1507
    %v1509 = vpop.f32.mrb[0].mxu0
    %v1510 = vpop.f32.mrb[0].mxu0
    %v1511 = vadd.f32 %v1414, %v1510
    %v1512 = vpop.f32.mrb[0].mxu0
    %1513 = vmatprep.mubr.bf16.mxu0 %v696
    %1514 = vmatmul.mubr.bf16.gmra.mrb[0].mxu0 %v688
    %v1515 = vpop.f32.mrb[0].mxu0
    %v1516 = vadd.f32 %v1419, %v1515
    %v1517 = vpop.f32.mrb[0].mxu0
    %v1518 = vpop.f32.mrb[0].mxu0
    %v1519 = vadd.f32 %v1422, %v1518
    %v1520 = vpop.f32.mrb[0].mxu0
    %1521 = vmatprep.mubr.bf16.mxu0 %v697
    %1522 = vmatmul.mubr.bf16.gmra.mrb[0].mxu0 %v689
    %v1523 = vpop.f32.mrb[0].mxu0
    %v1524 = vadd.f32 %v1427, %v1523
    %v1525 = vpop.f32.mrb[0].mxu0
    %v1526 = vpop.f32.mrb[0].mxu0
    %v1527 = vadd.f32 %v1430, %v1526
    %v1528 = vpop.f32.mrb[0].mxu0
    %1529 = vdwg.mxu0
    %1530 = vmatprep.subr.bf16.mxu0 0
    %1531 = vmatpush1.bf16.msra.mxu0 %v1224
    %1532 = vmatprep.subr.bf16.mxu0 0
    %1533 = vmatpush1.bf16.msra.mxu0 %v1225
    %1534 = vmatprep.subr.bf16.mxu0 0
    %1535 = vmatpush1.bf16.msra.mxu0 %v1226
    %1536 = vmatprep.subr.bf16.mxu0 0
    %1537 = vmatpush1.bf16.msra.mxu0 %v1227
    %1538 = vmatprep.subr.bf16.mxu0 0
    %1539 = vmatpush1.bf16.msra.mxu0 %v1228
    %1540 = vmatprep.subr.bf16.mxu0 0
    %1541 = vmatpush1.bf16.msra.mxu0 %v1229
    %1542 = vmatprep.subr.bf16.mxu0 0
    %1543 = vmatpush1.bf16.msra.mxu0 %v1230
    %1544 = vmatprep.subr.bf16.mxu0 0
    %1545 = vmatpush1.bf16.msra.mxu0 %v1231
    %1546 = vmatprep.subr.bf16.mxu0 0
    %1547 = vmatpush1.bf16.msra.mxu0 %v1232
    %1548 = vmatprep.subr.bf16.mxu0 0
    %1549 = vmatpush1.bf16.msra.mxu0 %v1233
    %1550 = vmatprep.subr.bf16.mxu0 0
    %1551 = vmatpush1.bf16.msra.mxu0 %v1234
    %1552 = vmatprep.subr.bf16.mxu0 0
    %1553 = vmatpush1.bf16.msra.mxu0 %v1235
    %1554 = vmatprep.subr.bf16.mxu0 0
    %1555 = vmatpush1.bf16.msra.mxu0 %v1236
    %1556 = vmatprep.subr.bf16.mxu0 0
    %1557 = vmatpush1.bf16.msra.mxu0 %v1237
    %1558 = vmatprep.subr.bf16.mxu0 0
    %1559 = vmatpush1.bf16.msra.mxu0 %v1238
    %1560 = vmatprep.subr.bf16.mxu0 0
    %1561 = vmatpush1.bf16.msra.mxu0 %v1239
    %1562 = vmatprep.mubr.bf16.mxu0 %v726
    %1563 = vmatmul.mubr.bf16.gmra.mrb[0].mxu0 %v710
    %v1564 = vpop.f32.mrb[0].mxu0
    %v1565 = vadd.f32 %v1468, %v1564
    %v1566 = vpop.f32.mrb[0].mxu0
    %v1567 = vpop.f32.mrb[0].mxu0
    %v1568 = vadd.f32 %v1471, %v1567
    %v1569 = vpop.f32.mrb[0].mxu0
    %1570 = vmatprep.mubr.bf16.mxu0 %v727
    %1571 = vmatmul.mubr.bf16.gmra.mrb[0].mxu0 %v711
    %v1572 = vpop.f32.mrb[0].mxu0
    %v1573 = vadd.f32 %v1476, %v1572
    %v1574 = vpop.f32.mrb[0].mxu0
    %v1575 = vpop.f32.mrb[0].mxu0
    %v1576 = vadd.f32 %v1479, %v1575
    %v1577 = vpop.f32.mrb[0].mxu0
    %1578 = vmatprep.mubr.bf16.mxu0 %v728
    %1579 = vmatmul.mubr.bf16.gmra.mrb[0].mxu0 %v712
    %v1580 = vpop.f32.mrb[0].mxu0
    %v1581 = vadd.f32 %v1484, %v1580
    %v1582 = vpop.f32.mrb[0].mxu0
    %v1583 = vpop.f32.mrb[0].mxu0
    %v1584 = vadd.f32 %v1487, %v1583
    %v1585 = vpop.f32.mrb[0].mxu0
    %1586 = vmatprep.mubr.bf16.mxu0 %v729
    %1587 = vmatmul.mubr.bf16.gmra.mrb[0].mxu0 %v713
    %v1588 = vpop.f32.mrb[0].mxu0
    %v1589 = vadd.f32 %v1492, %v1588
    %v1590 = vpop.f32.mrb[0].mxu0
    %v1591 = vpop.f32.mrb[0].mxu0
    %v1592 = vadd.f32 %v1495, %v1591
    %v1593 = vpop.f32.mrb[0].mxu0
    %1594 = vmatprep.mubr.bf16.mxu0 %v730
    %1595 = vmatmul.mubr.bf16.gmra.mrb[0].mxu0 %v714
    %v1596 = vpop.f32.mrb[0].mxu0
    %v1597 = vadd.f32 %v1500, %v1596
    %v1598 = vpop.f32.mrb[0].mxu0
    %v1599 = vpop.f32.mrb[0].mxu0
    %v1600 = vadd.f32 %v1503, %v1599
    %v1601 = vpop.f32.mrb[0].mxu0
    %1602 = vmatprep.mubr.bf16.mxu0 %v731
    %1603 = vmatmul.mubr.bf16.gmra.mrb[0].mxu0 %v715
    %v1604 = vpop.f32.mrb[0].mxu0
    %v1605 = vadd.f32 %v1508, %v1604
    %v1606 = vpop.f32.mrb[0].mxu0
    %v1607 = vpop.f32.mrb[0].mxu0
    %v1608 = vadd.f32 %v1511, %v1607
    %v1609 = vpop.f32.mrb[0].mxu0
    %1610 = vmatprep.mubr.bf16.mxu0 %v732
    %1611 = vmatmul.mubr.bf16.gmra.mrb[0].mxu0 %v716
    %v1612 = vpop.f32.mrb[0].mxu0
    %v1613 = vadd.f32 %v1516, %v1612
    %v1614 = vpop.f32.mrb[0].mxu0
    %v1615 = vpop.f32.mrb[0].mxu0
    %v1616 = vadd.f32 %v1519, %v1615
    %v1617 = vpop.f32.mrb[0].mxu0
    %1618 = vmatprep.mubr.bf16.mxu0 %v733
    %1619 = vmatmul.mubr.bf16.gmra.mrb[0].mxu0 %v717
    %v1620 = vpop.f32.mrb[0].mxu0
    %v1621 = vadd.f32 %v1524, %v1620
    %v1622 = vpop.f32.mrb[0].mxu0
    %v1623 = vpop.f32.mrb[0].mxu0
    %v1624 = vadd.f32 %v1527, %v1623
    %v1625 = vpop.f32.mrb[0].mxu0
    %1626 = vdwg.mxu0
    %1627 = vmatprep.subr.bf16.mxu0 0
    %1628 = vmatpush1.bf16.msra.mxu0 %v1240
    %1629 = vmatprep.subr.bf16.mxu0 0
    %1630 = vmatpush1.bf16.msra.mxu0 %v1241
    %1631 = vmatprep.subr.bf16.mxu0 0
    %1632 = vmatpush1.bf16.msra.mxu0 %v1242
    %1633 = vmatprep.subr.bf16.mxu0 0
    %1634 = vmatpush1.bf16.msra.mxu0 %v1243
    %1635 = vmatprep.subr.bf16.mxu0 0
    %1636 = vmatpush1.bf16.msra.mxu0 %v1244
    %1637 = vmatprep.subr.bf16.mxu0 0
    %1638 = vmatpush1.bf16.msra.mxu0 %v1245
    %1639 = vmatprep.subr.bf16.mxu0 0
    %1640 = vmatpush1.bf16.msra.mxu0 %v1246
    %1641 = vmatprep.subr.bf16.mxu0 0
    %1642 = vmatpush1.bf16.msra.mxu0 %v1247
    %1643 = vmatprep.subr.bf16.mxu0 0
    %1644 = vmatpush1.bf16.msra.mxu0 %v1248
    %1645 = vmatprep.subr.bf16.mxu0 0
    %1646 = vmatpush1.bf16.msra.mxu0 %v1249
    %1647 = vmatprep.subr.bf16.mxu0 0
    %1648 = vmatpush1.bf16.msra.mxu0 %v1250
    %1649 = vmatprep.subr.bf16.mxu0 0
    %1650 = vmatpush1.bf16.msra.mxu0 %v1251
    %1651 = vmatprep.subr.bf16.mxu0 0
    %1652 = vmatpush1.bf16.msra.mxu0 %v1252
    %1653 = vmatprep.subr.bf16.mxu0 0
    %1654 = vmatpush1.bf16.msra.mxu0 %v1253
    %1655 = vmatprep.subr.bf16.mxu0 0
    %1656 = vmatpush1.bf16.msra.mxu0 %v1254
    %1657 = vmatprep.subr.bf16.mxu0 0
    %1658 = vmatpush1.bf16.msra.mxu0 %v1255
    %1659 = vmatprep.mubr.bf16.mxu0 %v610
    %1660 = vmatmul.mubr.bf16.gmra.mrb[0].mxu0 %v505
    %v1661 = vpop.f32.mrb[0].mxu0
    %v1662 = vadd.f32 %v1565, %v1661
    %v1663 = vpop.f32.mrb[0].mxu0
    %v1664 = vpop.f32.mrb[0].mxu0
    %v1665 = vadd.f32 %v1568, %v1664
    %v1666 = vpop.f32.mrb[0].mxu0
    %1667 = vmatprep.mubr.bf16.mxu0 %v611
    %1668 = vmatmul.mubr.bf16.gmra.mrb[0].mxu0 %v506
    %v1669 = vpop.f32.mrb[0].mxu0
    %v1670 = vadd.f32 %v1573, %v1669
    %v1671 = vpop.f32.mrb[0].mxu0
    %v1672 = vpop.f32.mrb[0].mxu0
    %v1673 = vadd.f32 %v1576, %v1672
    %v1674 = vpop.f32.mrb[0].mxu0
    %1675 = vmatprep.mubr.bf16.mxu0 %v612
    %1676 = vmatmul.mubr.bf16.gmra.mrb[0].mxu0 %v507
    %v1677 = vpop.f32.mrb[0].mxu0
    %v1678 = vadd.f32 %v1581, %v1677
    %v1679 = vpop.f32.mrb[0].mxu0
    %v1680 = vpop.f32.mrb[0].mxu0
    %v1681 = vadd.f32 %v1584, %v1680
    %v1682 = vpop.f32.mrb[0].mxu0
    %1683 = vmatprep.mubr.bf16.mxu0 %v748
    %1684 = vmatmul.mubr.bf16.gmra.mrb[0].mxu0 %v734
    %v1685 = vpop.f32.mrb[0].mxu0
    %v1686 = vadd.f32 %v1589, %v1685
    %v1687 = vpop.f32.mrb[0].mxu0
    %v1688 = vpop.f32.mrb[0].mxu0
    %v1689 = vadd.f32 %v1592, %v1688
    %v1690 = vpop.f32.mrb[0].mxu0
    %1691 = vmatprep.mubr.bf16.mxu0 %v614
    %1692 = vmatmul.mubr.bf16.gmra.mrb[0].mxu0 %v509
    %v1693 = vpop.f32.mrb[0].mxu0
    %v1694 = vadd.f32 %v1597, %v1693
    %v1695 = vpop.f32.mrb[0].mxu0
    %v1696 = vpop.f32.mrb[0].mxu0
    %v1697 = vadd.f32 %v1600, %v1696
    %v1698 = vpop.f32.mrb[0].mxu0
    %1699 = vmatprep.mubr.bf16.mxu0 %v615
    %1700 = vmatmul.mubr.bf16.gmra.mrb[0].mxu0 %v510
    %v1701 = vpop.f32.mrb[0].mxu0
    %v1702 = vadd.f32 %v1605, %v1701
    %v1703 = vpop.f32.mrb[0].mxu0
    %v1704 = vpop.f32.mrb[0].mxu0
    %v1705 = vadd.f32 %v1608, %v1704
    %v1706 = vpop.f32.mrb[0].mxu0
    %1707 = vmatprep.mubr.bf16.mxu0 %v616
    %1708 = vmatmul.mubr.bf16.gmra.mrb[0].mxu0 %v511
    %v1709 = vpop.f32.mrb[0].mxu0
    %v1710 = vadd.f32 %v1613, %v1709
    %v1711 = vpop.f32.mrb[0].mxu0
    %v1712 = vpop.f32.mrb[0].mxu0
    %v1713 = vadd.f32 %v1616, %v1712
    %v1714 = vpop.f32.mrb[0].mxu0
    %1715 = vmatprep.mubr.bf16.mxu0 %v749
    %1716 = vmatmul.mubr.bf16.gmra.mrb[0].mxu0 %v735
    %v1717 = vpop.f32.mrb[0].mxu0
    %v1718 = vadd.f32 %v1621, %v1717
    %v1719 = vpop.f32.mrb[0].mxu0
    %v1720 = vpop.f32.mrb[0].mxu0
    %v1721 = vadd.f32 %v1624, %v1720
    %v1722 = vpop.f32.mrb[0].mxu0
    %1723 = vdwg.mxu0
    %1724 = vmatprep.subr.bf16.mxu0 0
    %1725 = vmatpush1.bf16.msra.mxu0 %v1256
    %1726 = vmatprep.subr.bf16.mxu0 0
    %1727 = vmatpush1.bf16.msra.mxu0 %v1257
    %1728 = vmatprep.subr.bf16.mxu0 0
    %1729 = vmatpush1.bf16.msra.mxu0 %v1258
    %1730 = vmatprep.subr.bf16.mxu0 0
    %1731 = vmatpush1.bf16.msra.mxu0 %v1259
    %1732 = vmatprep.subr.bf16.mxu0 0
    %1733 = vmatpush1.bf16.msra.mxu0 %v1260
    %1734 = vmatprep.subr.bf16.mxu0 0
    %1735 = vmatpush1.bf16.msra.mxu0 %v1261
    %1736 = vmatprep.subr.bf16.mxu0 0
    %1737 = vmatpush1.bf16.msra.mxu0 %v1262
    %1738 = vmatprep.subr.bf16.mxu0 0
    %1739 = vmatpush1.bf16.msra.mxu0 %v1263
    %1740 = vmatprep.subr.bf16.mxu0 0
    %1741 = vmatpush1.bf16.msra.mxu0 0
    %1742 = vmatprep.subr.bf16.mxu0 0
    %1743 = vmatpush1.bf16.msra.mxu0 0
    %1744 = vmatprep.subr.bf16.mxu0 0
    %1745 = vmatpush1.bf16.msra.mxu0 0
    %1746 = vmatprep.subr.bf16.mxu0 0
    %1747 = vmatpush1.bf16.msra.mxu0 0
    %1748 = vmatprep.subr.bf16.mxu0 0
    %1749 = vmatpush1.bf16.msra.mxu0 0
    %1750 = vmatprep.subr.bf16.mxu0 0
    %1751 = vmatpush1.bf16.msra.mxu0 0
    %1752 = vmatprep.subr.bf16.mxu0 0
    %1753 = vmatpush1.bf16.msra.mxu0 0
    %1754 = vmatprep.subr.bf16.mxu0 0
    %1755 = vmatpush1.bf16.msra.mxu0 0
    %1756 = vmatprep.mubr.bf16.mxu0 0
    %1757 = vmatmul.mubr.bf16.gmra.mrb[0].mxu0 %v683
    %v1758 = vpop.f32.mrb[0].mxu0
    %v1759 = vadd.f32 %v1662, %v1758
    %v1760 = vpop.f32.mrb[0].mxu0
    %v1761 = vpop.f32.mrb[0].mxu0
    %v1762 = vadd.f32 %v1665, %v1761
    %v1763 = vpop.f32.mrb[0].mxu0
    %1764 = vmatprep.mubr.bf16.mxu0 0
    %1765 = vmatmul.mubr.bf16.gmra.mrb[0].mxu0 %v684
    %v1766 = vpop.f32.mrb[0].mxu0
    %v1767 = vadd.f32 %v1670, %v1766
    %v1768 = vpop.f32.mrb[0].mxu0
    %v1769 = vpop.f32.mrb[0].mxu0
    %v1770 = vadd.f32 %v1673, %v1769
    %v1771 = vpop.f32.mrb[0].mxu0
    %1772 = vmatprep.mubr.bf16.mxu0 0
    %1773 = vmatmul.mubr.bf16.gmra.mrb[0].mxu0 %v685
    %v1774 = vpop.f32.mrb[0].mxu0
    %v1775 = vadd.f32 %v1678, %v1774
    %v1776 = vpop.f32.mrb[0].mxu0
    %v1777 = vpop.f32.mrb[0].mxu0
    %v1778 = vadd.f32 %v1681, %v1777
    %v1779 = vpop.f32.mrb[0].mxu0
    %1780 = vmatprep.mubr.bf16.mxu0 0
    %1781 = vmatmul.mubr.bf16.gmra.mrb[0].mxu0 %v758
    %v1782 = vpop.f32.mrb[0].mxu0
    %v1783 = vadd.f32 %v1686, %v1782
    %v1784 = vpop.f32.mrb[0].mxu0
    %v1785 = vpop.f32.mrb[0].mxu0
    %v1786 = vadd.f32 %v1689, %v1785
    %v1787 = vpop.f32.mrb[0].mxu0
    %1788 = vmatprep.mubr.bf16.mxu0 0
    %1789 = vmatmul.mubr.bf16.gmra.mrb[0].mxu0 %v687
    %v1790 = vpop.f32.mrb[0].mxu0
    %v1791 = vadd.f32 %v1694, %v1790
    %v1792 = vpop.f32.mrb[0].mxu0
    %v1793 = vpop.f32.mrb[0].mxu0
    %v1794 = vadd.f32 %v1697, %v1793
    %v1795 = vpop.f32.mrb[0].mxu0
    %1796 = vmatprep.mubr.bf16.mxu0 0
    %1797 = vmatmul.mubr.bf16.gmra.mrb[0].mxu0 %v688
    %v1798 = vpop.f32.mrb[0].mxu0
    %v1799 = vadd.f32 %v1702, %v1798
    %v1800 = vpop.f32.mrb[0].mxu0
    %v1801 = vpop.f32.mrb[0].mxu0
    %v1802 = vadd.f32 %v1705, %v1801
    %v1803 = vpop.f32.mrb[0].mxu0
    %1804 = vmatprep.mubr.bf16.mxu0 0
    %1805 = vmatmul.mubr.bf16.gmra.mrb[0].mxu0 %v689
    %v1806 = vpop.f32.mrb[0].mxu0
    %v1807 = vadd.f32 %v1710, %v1806
    %v1808 = vpop.f32.mrb[0].mxu0
    %v1809 = vpop.f32.mrb[0].mxu0
    %v1810 = vadd.f32 %v1713, %v1809
    %v1811 = vpop.f32.mrb[0].mxu0
    %1812 = vmatprep.mubr.bf16.mxu0 0
    %1813 = vmatmul.mubr.bf16.gmra.mrb[0].mxu0 %v759
    %v1814 = vpop.f32.mrb[0].mxu0
    %v1815 = vadd.f32 %v1718, %v1814
    %v1816 = vpop.f32.mrb[0].mxu0
    %v1817 = vpop.f32.mrb[0].mxu0
    %v1818 = vadd.f32 %v1721, %v1817
    %v1819 = vpop.f32.mrb[0].mxu0
    %1820 = vdwg.mxu0
    %v1821 = vld [vmem:[%s6] sm:$0x1]
    %v1822 = vld [vmem:[%s7] sm:$0x1]
    %v1823 = vadd.f32 %v1759, %v1762
    %v1824 = vadd.f32 %v1823, %v1767
    %v1825 = vadd.f32 %v1824, %v1770
    %v1826 = vadd.f32 %v1825, %v1775
    %v1827 = vadd.f32 %v1826, %v1778
    %v1828 = vadd.f32 %v1827, %v1783
    %v1829 = vadd.f32 %v1828, %v1786
    %v1830 = vadd.f32 %v1829, %v1791
    %v1831 = vadd.f32 %v1830, %v1794
    %v1832 = vadd.f32 %v1831, %v1799
    %v1833 = vadd.f32 %v1832, %v1802
    %v1834 = vadd.f32 %v1833, %v1807
    %v1835 = vadd.f32 %v1834, %v1810
    %v1836 = vadd.f32 %v1835, %v1815
    %v1837 = vadd.f32 %v1836, %v1818
    %v1838 = vrot.slane %v1837, 4
    %v1839 = vadd.f32 %v1837, %v1838
    %v1840 = vrot.slane %v1839, 2
    %v1841 = vadd.f32 %v1839, %v1840
    %v1842 = vrot.slane %v1841, 1
    %v1843 = vadd.f32 %v1841, %v1842
    %v1844 = vmul.f32 %v1759, %v1759
    %v1845 = vmul.f32 %v1762, %v1762
    %v1846 = vmul.f32 %v1767, %v1767
    %v1847 = vmul.f32 %v1770, %v1770
    %v1848 = vmul.f32 %v1775, %v1775
    %v1849 = vmul.f32 %v1778, %v1778
    %v1850 = vmul.f32 %v1783, %v1783
    %v1851 = vmul.f32 %v1786, %v1786
    %v1852 = vmul.f32 %v1791, %v1791
    %v1853 = vmul.f32 %v1794, %v1794
    %v1854 = vmul.f32 %v1799, %v1799
    %v1855 = vmul.f32 %v1802, %v1802
    %v1856 = vmul.f32 %v1807, %v1807
    %v1857 = vmul.f32 %v1810, %v1810
    %v1858 = vmul.f32 %v1815, %v1815
    %v1859 = vmul.f32 %v1818, %v1818
    %v1860 = vadd.f32 %v1844, %v1845
    %v1861 = vadd.f32 %v1860, %v1846
    %v1862 = vadd.f32 %v1861, %v1847
    %v1863 = vadd.f32 %v1862, %v1848
    %v1864 = vadd.f32 %v1863, %v1849
    %v1865 = vadd.f32 %v1864, %v1850
    %v1866 = vadd.f32 %v1865, %v1851
    %v1867 = vadd.f32 %v1866, %v1852
    %v1868 = vadd.f32 %v1867, %v1853
    %v1869 = vadd.f32 %v1868, %v1854
    %v1870 = vadd.f32 %v1869, %v1855
    %v1871 = vadd.f32 %v1870, %v1856
    %v1872 = vadd.f32 %v1871, %v1857
    %v1873 = vadd.f32 %v1872, %v1858
    %v1874 = vadd.f32 %v1873, %v1859
    %v1875 = vrot.slane %v1874, 4
    %v1876 = vadd.f32 %v1874, %v1875
    %v1877 = vrot.slane %v1876, 2
    %v1878 = vadd.f32 %v1876, %v1877
    %v1879 = vrot.slane %v1878, 1
    %v1880 = vadd.f32 %v1878, %v1879
    %v1881 = vmul.f32 %v1843, 0.0078125
    %v1882 = vmul.f32 %v1880, 0.0078125
    %v1883 = vmul.f32 %v1881, %v1881
    %v1884 = vsub.f32 %v1882, %v1883
    %v1885 = vadd.f32 %v1884, 1e-05
    %v1886 = vrsqrt.pop %v1885
    %v1887 = vmul.f32 %v1821, %v1886
    %v1888 = vmul.f32 %v1881, %v1887
    %v1889 = vsub.f32 %v1822, %v1888
    %v1891 = vlaneseq
    %v1892 = vshrl.u32 %v1891, 7
    %v1893 = vsub.s32 0, %v1892
    %v1894 = vrot.slane %v1887, %v1893
    %v1896 = vmul.f32 %v1759, %v1894
    %v1897 = vmul.f32 %v1762, %v1894
    %v1898 = vmul.f32 %v1767, %v1894
    %v1899 = vmul.f32 %v1770, %v1894
    %v1900 = vmul.f32 %v1775, %v1894
    %v1901 = vmul.f32 %v1778, %v1894
    %v1902 = vmul.f32 %v1783, %v1894
    %v1903 = vmul.f32 %v1786, %v1894
    %v1904 = vmul.f32 %v1791, %v1894
    %v1905 = vmul.f32 %v1794, %v1894
    %v1906 = vmul.f32 %v1799, %v1894
    %v1907 = vmul.f32 %v1802, %v1894
    %v1908 = vmul.f32 %v1807, %v1894
    %v1909 = vmul.f32 %v1810, %v1894
    %v1910 = vmul.f32 %v1815, %v1894
    %v1911 = vmul.f32 %v1818, %v1894
    %v1913 = vlaneseq
    %v1914 = vshrl.u32 %v1913, 7
    %v1915 = vsub.s32 0, %v1914
    %v1916 = vrot.slane %v1889, %v1915
    %v1918 = vadd.f32 %v1896, %v1916
    %v1919 = vadd.f32 %v1897, %v1916
    %v1920 = vadd.f32 %v1898, %v1916
    %v1921 = vadd.f32 %v1899, %v1916
    %v1922 = vadd.f32 %v1900, %v1916
    %v1923 = vadd.f32 %v1901, %v1916
    %v1924 = vadd.f32 %v1902, %v1916
    %v1925 = vadd.f32 %v1903, %v1916
    %v1926 = vadd.f32 %v1904, %v1916
    %v1927 = vadd.f32 %v1905, %v1916
    %v1928 = vadd.f32 %v1906, %v1916
    %v1929 = vadd.f32 %v1907, %v1916
    %v1930 = vadd.f32 %v1908, %v1916
    %v1931 = vadd.f32 %v1909, %v1916
    %v1932 = vadd.f32 %v1910, %v1916
    %v1933 = vadd.f32 %v1911, %v1916
    %v1934 = vmax.f32 %v1918, 0.0
    %v1935 = vmax.f32 %v1919, 0.0
    %v1936 = vmax.f32 %v1920, 0.0
    %v1937 = vmax.f32 %v1921, 0.0
    %v1938 = vmax.f32 %v1922, 0.0
    %v1939 = vmax.f32 %v1923, 0.0
    %v1940 = vmax.f32 %v1924, 0.0
    %v1941 = vmax.f32 %v1925, 0.0
    %v1942 = vmax.f32 %v1926, 0.0
    %v1943 = vmax.f32 %v1927, 0.0
    %v1944 = vmax.f32 %v1928, 0.0
    %v1945 = vmax.f32 %v1929, 0.0
    %v1946 = vmax.f32 %v1930, 0.0
    %v1947 = vmax.f32 %v1931, 0.0
    %v1948 = vmax.f32 %v1932, 0.0
    %v1949 = vmax.f32 %v1933, 0.0
    %v1950 = vpack.c.bf16 %v1935, %v1934
    %v1951 = vpack.c.bf16 %v1937, %v1936
    %v1952 = vpack.c.bf16 %v1939, %v1938
    %v1953 = vpack.c.bf16 %v1941, %v1940
    %v1954 = vpack.c.bf16 %v1943, %v1942
    %v1955 = vpack.c.bf16 %v1945, %v1944
    %v1956 = vpack.c.bf16 %v1947, %v1946
    %v1957 = vpack.c.bf16 %v1949, %v1948
    %v1958 = vld [vmem:[#allocation9] sm:$0xf]
    %v1959 = vld [vmem:[#allocation9 + $0x4] sm:$0xf]
    %v1960 = vld [vmem:[#allocation9 + $0x8] sm:$0xf]
    %v1961 = vld [vmem:[#allocation9 + $0xc] sm:$0xf]
    %v1962 = vld [vmem:[#allocation9 + $0x10] sm:$0xf]
    %v1963 = vld [vmem:[#allocation9 + $0x14] sm:$0xf]
    %v1964 = vld [vmem:[#allocation9 + $0x18] sm:$0xf]
    %v1965 = vld [vmem:[#allocation9 + $0x1c] sm:$0xf]
    %v1966 = vld [vmem:[#allocation9 + $0x20] sm:$0xf]
    %v1967 = vld [vmem:[#allocation9 + $0x24] sm:$0xf]
    %v1968 = vld [vmem:[#allocation9 + $0x28] sm:$0xf]
    %v1969 = vld [vmem:[#allocation9 + $0x2c] sm:$0xf]
    %v1970 = vld [vmem:[#allocation9 + $0x30] sm:$0xf]
    %v1971 = vld [vmem:[#allocation9 + $0x34] sm:$0xf]
    %v1972 = vld [vmem:[#allocation9 + $0x38] sm:$0xf]
    %v1973 = vld [vmem:[#allocation9 + $0x3c] sm:$0xf]
    %v1990 = vunpack.c.l.b16 %v1958
    %v1991 = vunpack.c.l.b16 %v1959
    %v1992 = vunpack.c.l.b16 %v1960
    %v1993 = vunpack.c.l.b16 %v1961
    %v1994 = vunpack.c.l.b16 %v1962
    %v1995 = vunpack.c.l.b16 %v1963
    %v1996 = vunpack.c.l.b16 %v1964
    %v1997 = vunpack.c.l.b16 %v1965
    %v1998 = vunpack.c.l.b16 %v1966
    %v1999 = vunpack.c.l.b16 %v1967
    %v2000 = vunpack.c.l.b16 %v1968
    %v2001 = vunpack.c.l.b16 %v1969
    %v2002 = vunpack.c.l.b16 %v1970
    %v2003 = vunpack.c.l.b16 %v1971
    %v2004 = vunpack.c.l.b16 %v1972
    %v2005 = vunpack.c.l.b16 %v1973
    %v2006 = vpack.c.b16 %v1991, %v1990
    %v2007 = vpack.c.b16 %v1993, %v1992
    %v2008 = vpack.c.b16 %v1995, %v1994
    %v2009 = vpack.c.b16 %v1997, %v1996
    %v2010 = vpack.c.b16 %v1999, %v1998
    %v2011 = vpack.c.b16 %v2001, %v2000
    %v2012 = vpack.c.b16 %v2003, %v2002
    %v2013 = vpack.c.b16 %v2005, %v2004
    %2022 = vmatprep.subr.bf16.mxu0 0
    %2023 = vmatpush1.bf16.msra.mxu0 %v2006
    %2024 = vmatprep.subr.bf16.mxu0 0
    %2025 = vmatpush1.bf16.msra.mxu0 %v2007
    %2026 = vmatprep.subr.bf16.mxu0 0
    %2027 = vmatpush1.bf16.msra.mxu0 %v2008
    %2028 = vmatprep.subr.bf16.mxu0 0
    %2029 = vmatpush1.bf16.msra.mxu0 %v2009
    %2030 = vmatprep.subr.bf16.mxu0 0
    %2031 = vmatpush1.bf16.msra.mxu0 %v2010
    %2032 = vmatprep.subr.bf16.mxu0 0
    %2033 = vmatpush1.bf16.msra.mxu0 %v2011
    %2034 = vmatprep.subr.bf16.mxu0 0
    %2035 = vmatpush1.bf16.msra.mxu0 %v2012
    %2036 = vmatprep.subr.bf16.mxu0 0
    %2037 = vmatpush1.bf16.msra.mxu0 %v2013
    %2038 = vmatprep.subr.bf16.mxu0 0
    %2039 = vmatpush1.bf16.msra.mxu0 0
    %2040 = vmatprep.subr.bf16.mxu0 0
    %2041 = vmatpush1.bf16.msra.mxu0 0
    %2042 = vmatprep.subr.bf16.mxu0 0
    %2043 = vmatpush1.bf16.msra.mxu0 0
    %2044 = vmatprep.subr.bf16.mxu0 0
    %2045 = vmatpush1.bf16.msra.mxu0 0
    %2046 = vmatprep.subr.bf16.mxu0 0
    %2047 = vmatpush1.bf16.msra.mxu0 0
    %2048 = vmatprep.subr.bf16.mxu0 0
    %2049 = vmatpush1.bf16.msra.mxu0 0
    %2050 = vmatprep.subr.bf16.mxu0 0
    %2051 = vmatpush1.bf16.msra.mxu0 0
    %2052 = vmatprep.subr.bf16.mxu0 0
    %2053 = vmatpush1.bf16.msra.mxu0 0
    %2054 = vmatprep.mubr.bf16.mxu0 0
    %2055 = vmatmul.mubr.bf16.gmra.mrb[0].mxu0 %v1950
    %v2056 = vpop.f32.mrb[0].mxu0
    %v2057 = vadd.f32 0.0, %v2056
    %v2058 = vpop.f32.mrb[0].mxu0
    %v2059 = vpop.f32.mrb[0].mxu0
    %v2060 = vadd.f32 0.0, %v2059
    %v2061 = vpop.f32.mrb[0].mxu0
    %2062 = vmatprep.mubr.bf16.mxu0 0
    %2063 = vmatmul.mubr.bf16.gmra.mrb[0].mxu0 %v1951
    %v2064 = vpop.f32.mrb[0].mxu0
    %v2065 = vadd.f32 0.0, %v2064
    %v2066 = vpop.f32.mrb[0].mxu0
    %v2067 = vpop.f32.mrb[0].mxu0
    %v2068 = vadd.f32 0.0, %v2067
    %v2069 = vpop.f32.mrb[0].mxu0
    %2070 = vmatprep.mubr.bf16.mxu0 0
    %2071 = vmatmul.mubr.bf16.gmra.mrb[0].mxu0 %v1952
    %v2072 = vpop.f32.mrb[0].mxu0
    %v2073 = vadd.f32 0.0, %v2072
    %v2074 = vpop.f32.mrb[0].mxu0
    %v2075 = vpop.f32.mrb[0].mxu0
    %v2076 = vadd.f32 0.0, %v2075
    %v2077 = vpop.f32.mrb[0].mxu0
    %2078 = vmatprep.mubr.bf16.mxu0 0
    %2079 = vmatmul.mubr.bf16.gmra.mrb[0].mxu0 %v1953
    %v2080 = vpop.f32.mrb[0].mxu0
    %v2081 = vadd.f32 0.0, %v2080
    %v2082 = vpop.f32.mrb[0].mxu0
    %v2083 = vpop.f32.mrb[0].mxu0
    %v2084 = vadd.f32 0.0, %v2083
    %v2085 = vpop.f32.mrb[0].mxu0
    %2086 = vmatprep.mubr.bf16.mxu0 0
    %2087 = vmatmul.mubr.bf16.gmra.mrb[0].mxu0 %v1954
    %v2088 = vpop.f32.mrb[0].mxu0
    %v2089 = vadd.f32 0.0, %v2088
    %v2090 = vpop.f32.mrb[0].mxu0
    %v2091 = vpop.f32.mrb[0].mxu0
    %v2092 = vadd.f32 0.0, %v2091
    %v2093 = vpop.f32.mrb[0].mxu0
    %2094 = vmatprep.mubr.bf16.mxu0 0
    %2095 = vmatmul.mubr.bf16.gmra.mrb[0].mxu0 %v1955
    %v2096 = vpop.f32.mrb[0].mxu0
    %v2097 = vadd.f32 0.0, %v2096
    %v2098 = vpop.f32.mrb[0].mxu0
    %v2099 = vpop.f32.mrb[0].mxu0
    %v2100 = vadd.f32 0.0, %v2099
    %v2101 = vpop.f32.mrb[0].mxu0
    %2102 = vmatprep.mubr.bf16.mxu0 0
    %2103 = vmatmul.mubr.bf16.gmra.mrb[0].mxu0 %v1956
    %v2104 = vpop.f32.mrb[0].mxu0
    %v2105 = vadd.f32 0.0, %v2104
    %v2106 = vpop.f32.mrb[0].mxu0
    %v2107 = vpop.f32.mrb[0].mxu0
    %v2108 = vadd.f32 0.0, %v2107
    %v2109 = vpop.f32.mrb[0].mxu0
    %2110 = vmatprep.mubr.bf16.mxu0 0
    %2111 = vmatmul.mubr.bf16.gmra.mrb[0].mxu0 %v1957
    %v2112 = vpop.f32.mrb[0].mxu0
    %v2113 = vadd.f32 0.0, %v2112
    %v2114 = vpop.f32.mrb[0].mxu0
    %v2115 = vpop.f32.mrb[0].mxu0
    %v2116 = vadd.f32 0.0, %v2115
    %v2117 = vpop.f32.mrb[0].mxu0
    %2118 = vdwg.mxu0
    %v2119 = vld [vmem:[%s8] sm:$0x1]
    %v2120 = vld [vmem:[%s9] sm:$0x1]
    %v2121 = vadd.f32 %v2057, %v2060
    %v2122 = vadd.f32 %v2121, %v2065
    %v2123 = vadd.f32 %v2122, %v2068
    %v2124 = vadd.f32 %v2123, %v2073
    %v2125 = vadd.f32 %v2124, %v2076
    %v2126 = vadd.f32 %v2125, %v2081
    %v2127 = vadd.f32 %v2126, %v2084
    %v2128 = vadd.f32 %v2127, %v2089
    %v2129 = vadd.f32 %v2128, %v2092
    %v2130 = vadd.f32 %v2129, %v2097
    %v2131 = vadd.f32 %v2130, %v2100
    %v2132 = vadd.f32 %v2131, %v2105
    %v2133 = vadd.f32 %v2132, %v2108
    %v2134 = vadd.f32 %v2133, %v2113
    %v2135 = vadd.f32 %v2134, %v2116
    %v2136 = vrot.slane %v2135, 4
    %v2137 = vadd.f32 %v2135, %v2136
    %v2138 = vrot.slane %v2137, 2
    %v2139 = vadd.f32 %v2137, %v2138
    %v2140 = vrot.slane %v2139, 1
    %v2141 = vadd.f32 %v2139, %v2140
    %v2142 = vmul.f32 %v2057, %v2057
    %v2143 = vmul.f32 %v2060, %v2060
    %v2144 = vmul.f32 %v2065, %v2065
    %v2145 = vmul.f32 %v2068, %v2068
    %v2146 = vmul.f32 %v2073, %v2073
    %v2147 = vmul.f32 %v2076, %v2076
    %v2148 = vmul.f32 %v2081, %v2081
    %v2149 = vmul.f32 %v2084, %v2084
    %v2150 = vmul.f32 %v2089, %v2089
    %v2151 = vmul.f32 %v2092, %v2092
    %v2152 = vmul.f32 %v2097, %v2097
    %v2153 = vmul.f32 %v2100, %v2100
    %v2154 = vmul.f32 %v2105, %v2105
    %v2155 = vmul.f32 %v2108, %v2108
    %v2156 = vmul.f32 %v2113, %v2113
    %v2157 = vmul.f32 %v2116, %v2116
    %v2158 = vadd.f32 %v2142, %v2143
    %v2159 = vadd.f32 %v2158, %v2144
    %v2160 = vadd.f32 %v2159, %v2145
    %v2161 = vadd.f32 %v2160, %v2146
    %v2162 = vadd.f32 %v2161, %v2147
    %v2163 = vadd.f32 %v2162, %v2148
    %v2164 = vadd.f32 %v2163, %v2149
    %v2165 = vadd.f32 %v2164, %v2150
    %v2166 = vadd.f32 %v2165, %v2151
    %v2167 = vadd.f32 %v2166, %v2152
    %v2168 = vadd.f32 %v2167, %v2153
    %v2169 = vadd.f32 %v2168, %v2154
    %v2170 = vadd.f32 %v2169, %v2155
    %v2171 = vadd.f32 %v2170, %v2156
    %v2172 = vadd.f32 %v2171, %v2157
    %v2173 = vrot.slane %v2172, 4
    %v2174 = vadd.f32 %v2172, %v2173
    %v2175 = vrot.slane %v2174, 2
    %v2176 = vadd.f32 %v2174, %v2175
    %v2177 = vrot.slane %v2176, 1
    %v2178 = vadd.f32 %v2176, %v2177
    %v2179 = vmul.f32 %v2141, 0.0078125
    %v2180 = vmul.f32 %v2178, 0.0078125
    %v2181 = vmul.f32 %v2179, %v2179
    %v2182 = vsub.f32 %v2180, %v2181
    %v2183 = vadd.f32 %v2182, 1e-05
    %v2184 = vrsqrt.pop %v2183
    %v2185 = vmul.f32 %v2119, %v2184
    %v2186 = vmul.f32 %v2179, %v2185
    %v2187 = vsub.f32 %v2120, %v2186
    %v2189 = vlaneseq
    %v2190 = vshrl.u32 %v2189, 7
    %v2191 = vsub.s32 0, %v2190
    %v2192 = vrot.slane %v2185, %v2191
    %v2194 = vmul.f32 %v2057, %v2192
    %v2195 = vmul.f32 %v2060, %v2192
    %v2196 = vmul.f32 %v2065, %v2192
    %v2197 = vmul.f32 %v2068, %v2192
    %v2198 = vmul.f32 %v2073, %v2192
    %v2199 = vmul.f32 %v2076, %v2192
    %v2200 = vmul.f32 %v2081, %v2192
    %v2201 = vmul.f32 %v2084, %v2192
    %v2202 = vmul.f32 %v2089, %v2192
    %v2203 = vmul.f32 %v2092, %v2192
    %v2204 = vmul.f32 %v2097, %v2192
    %v2205 = vmul.f32 %v2100, %v2192
    %v2206 = vmul.f32 %v2105, %v2192
    %v2207 = vmul.f32 %v2108, %v2192
    %v2208 = vmul.f32 %v2113, %v2192
    %v2209 = vmul.f32 %v2116, %v2192
    %v2211 = vlaneseq
    %v2212 = vshrl.u32 %v2211, 7
    %v2213 = vsub.s32 0, %v2212
    %v2214 = vrot.slane %v2187, %v2213
    %v2216 = vadd.f32 %v2194, %v2214
    %v2217 = vadd.f32 %v2195, %v2214
    %v2218 = vadd.f32 %v2196, %v2214
    %v2219 = vadd.f32 %v2197, %v2214
    %v2220 = vadd.f32 %v2198, %v2214
    %v2221 = vadd.f32 %v2199, %v2214
    %v2222 = vadd.f32 %v2200, %v2214
    %v2223 = vadd.f32 %v2201, %v2214
    %v2224 = vadd.f32 %v2202, %v2214
    %v2225 = vadd.f32 %v2203, %v2214
    %v2226 = vadd.f32 %v2204, %v2214
    %v2227 = vadd.f32 %v2205, %v2214
    %v2228 = vadd.f32 %v2206, %v2214
    %v2229 = vadd.f32 %v2207, %v2214
    %v2230 = vadd.f32 %v2208, %v2214
    %v2231 = vadd.f32 %v2209, %v2214
    %v2232 = vld [vmem:[#allocation3] sm:$0xff]
    %v2233 = vld [vmem:[#allocation3 + $0x8] sm:$0xff]
    %v2234 = vld [vmem:[#allocation3 + $0x10] sm:$0xff]
    %v2235 = vld [vmem:[#allocation3 + $0x18] sm:$0xff]
    %v2236 = vld [vmem:[#allocation3 + $0x20] sm:$0xff]
    %v2237 = vld [vmem:[#allocation3 + $0x28] sm:$0xff]
    %v2238 = vld [vmem:[#allocation3 + $0x30] sm:$0xff]
    %v2239 = vld [vmem:[#allocation3 + $0x38] sm:$0xff]
    %v2240 = vld [vmem:[#allocation3 + $0x40] sm:$0xff]
    %v2241 = vld [vmem:[#allocation3 + $0x48] sm:$0xff]
    %v2242 = vld [vmem:[#allocation3 + $0x50] sm:$0xff]
    %v2243 = vld [vmem:[#allocation3 + $0x58] sm:$0xff]
    %v2244 = vld [vmem:[#allocation3 + $0x60] sm:$0xff]
    %v2245 = vld [vmem:[#allocation3 + $0x68] sm:$0xff]
    %v2246 = vld [vmem:[#allocation3 + $0x70] sm:$0xff]
    %v2247 = vld [vmem:[#allocation3 + $0x78] sm:$0xff]
    %v2248 = vadd.f32 %v2216, %v2232
    %v2249 = vadd.f32 %v2217, %v2233
    %v2250 = vadd.f32 %v2218, %v2234
    %v2251 = vadd.f32 %v2219, %v2235
    %v2252 = vadd.f32 %v2220, %v2236
    %v2253 = vadd.f32 %v2221, %v2237
    %v2254 = vadd.f32 %v2222, %v2238
    %v2255 = vadd.f32 %v2223, %v2239
    %v2256 = vadd.f32 %v2224, %v2240
    %v2257 = vadd.f32 %v2225, %v2241
    %v2258 = vadd.f32 %v2226, %v2242
    %v2259 = vadd.f32 %v2227, %v2243
    %v2260 = vadd.f32 %v2228, %v2244
    %v2261 = vadd.f32 %v2229, %v2245
    %v2262 = vadd.f32 %v2230, %v2246
    %v2263 = vadd.f32 %v2231, %v2247
    %v2264 = vmax.f32 %v2248, 0.0
    %v2265 = vmax.f32 %v2249, 0.0
    %v2266 = vmax.f32 %v2250, 0.0
    %v2267 = vmax.f32 %v2251, 0.0
    %v2268 = vmax.f32 %v2252, 0.0
    %v2269 = vmax.f32 %v2253, 0.0
    %v2270 = vmax.f32 %v2254, 0.0
    %v2271 = vmax.f32 %v2255, 0.0
    %v2272 = vmax.f32 %v2256, 0.0
    %v2273 = vmax.f32 %v2257, 0.0
    %v2274 = vmax.f32 %v2258, 0.0
    %v2275 = vmax.f32 %v2259, 0.0
    %v2276 = vmax.f32 %v2260, 0.0
    %v2277 = vmax.f32 %v2261, 0.0
    %v2278 = vmax.f32 %v2262, 0.0
    %v2279 = vmax.f32 %v2263, 0.0
    %2280 = vst [vmem:[#allocation11] sm:$0xff] %v2264
    %2281 = vst [vmem:[#allocation11 + $0x8] sm:$0xff] %v2265
    %2282 = vst [vmem:[#allocation11 + $0x10] sm:$0xff] %v2266
    %2283 = vst [vmem:[#allocation11 + $0x18] sm:$0xff] %v2267
    %2284 = vst [vmem:[#allocation11 + $0x20] sm:$0xff] %v2268
    %2285 = vst [vmem:[#allocation11 + $0x28] sm:$0xff] %v2269
    %2286 = vst [vmem:[#allocation11 + $0x30] sm:$0xff] %v2270
    %2287 = vst [vmem:[#allocation11 + $0x38] sm:$0xff] %v2271
    %2288 = vst [vmem:[#allocation11 + $0x40] sm:$0xff] %v2272
    %2289 = vst [vmem:[#allocation11 + $0x48] sm:$0xff] %v2273
    %2290 = vst [vmem:[#allocation11 + $0x50] sm:$0xff] %v2274
    %2291 = vst [vmem:[#allocation11 + $0x58] sm:$0xff] %v2275
    %2292 = vst [vmem:[#allocation11 + $0x60] sm:$0xff] %v2276
    %2293 = vst [vmem:[#allocation11 + $0x68] sm:$0xff] %v2277
    %2294 = vst [vmem:[#allocation11 + $0x70] sm:$0xff] %v2278
    %2295 = vst [vmem:[#allocation11 + $0x78] sm:$0xff] %v2279
    // Predicated region
    $region58: #{tpu_custom_call.1} parent=1 // pred_check
      _
    $region59: #{tpu_custom_call.1} parent=1 // pred_check_branch
      %2297 = sbr.rel (0) target = $region61
    $region60: #{tpu_custom_call.1} parent=1 // pred_region
      %s2299 = ssub.s32 2048, 2048
      %2300 = vsyncadd [#allocation5], %s2299
      %s2301 = sshll.u32 [#allocation11], 4
      %s2302 = int_to_ptr.vmem [resolvable:$true] %s2301
      %2307 = dma.vmem_to_hbm [thread:$0]  %s2302, 2048, %s10, [#allocation5], 128, 128, 8
    $region61: #{tpu_custom_call.1} parent=1 // pred_fallthru
      _
    // Predicated region
    $region62: #{tpu_custom_call.1} parent=1 // pred_check
      _
    $region63: #{tpu_custom_call.1} parent=1 // pred_check_branch
      %2309 = sbr.rel (0) target = $region65
    $region64: #{tpu_custom_call.1} parent=1 // pred_region
      %2310 = dma.done [#allocation5], 2048
    $region65: #{tpu_custom_call.1} parent=1 // pred_fallthru
      _
    %2311 = vsyncpa [#allocation4], 1
    %2312 = vsyncpa [#allocation7], 1
    %2313 = vsyncpa [#allocation10], 1
    %2314 = vsyncpa [#allocation5], 1

</llo_original>
